<compile_context>
chip_gen: v7x
topology: tpu7x:2x2x1
jax: 0.10.0
libtpu: 0.0.40
codegen_flags: <defaults>
</compile_context>

<pallas_src>
import functools

import jax
import jax.numpy as jnp
from jax.experimental import pallas as pl
from jax.experimental.pallas import tpu as pltpu


def _phi(x):
    # elu(x) + 1: one EUP exp per element, selected on the VPU.
    return jnp.where(x > 0.0, x + 1.0, jnp.exp(x))


def _linear_attention_kernel(q_ref, k_ref, v_ref, o_ref, kv_acc, ksum_acc, *, eps):
    ki = pl.program_id(1)

    @pl.when(ki == 0)
    def _():
        kv_acc[...] = jnp.zeros_like(kv_acc)
        ksum_acc[...] = jnp.zeros_like(ksum_acc)

    k = k_ref[0].astype(jnp.float32)            # (TK, D)
    v = v_ref[0].astype(jnp.float32)            # (TK, E)
    k_phi = _phi(k)

    kv_acc[...] += jnp.dot(k_phi.T, v,
                           preferred_element_type=jnp.float32,
                           precision=jax.lax.Precision.HIGHEST)            # (D, E)
    ksum_acc[...] += jnp.sum(k_phi, axis=0, keepdims=True)                 # (1, D)

    @pl.when(ki == pl.num_programs(1) - 1)
    def _():
        q = q_ref[0].astype(jnp.float32)        # (N, D), resident across k
        q_phi = _phi(q)
        z = jnp.sum(q_phi * ksum_acc[...], axis=-1, keepdims=True) + eps   # (N, 1)
        ctx = jnp.dot(q_phi, kv_acc[...],
                      preferred_element_type=jnp.float32,
                      precision=jax.lax.Precision.HIGHEST)                 # (N, E)
        o_ref[0] = (ctx / z).astype(o_ref.dtype)


def linear_attention_forward(Q, K, V, *, eps=1e-6, block_k=None):
    """Q, K: (B, N, D); V: (B, N, E). Returns (B, N, E) in Q.dtype."""
    B, N, D = Q.shape
    Bv, Nv, E = V.shape
    assert K.shape == (B, N, D) and (Bv, Nv) == (B, N)

    if block_k is None:
        block_k = N
        for cand in (512, 256, 128, 64, 32, 16, 8):
            if N % cand == 0:
                block_k = cand
                break
    assert N % block_k == 0
    num_k = N // block_k

    kernel = functools.partial(_linear_attention_kernel, eps=float(eps))

    return pl.pallas_call(
        kernel,
        out_shape=jax.ShapeDtypeStruct((B, N, E), Q.dtype),
        grid=(B, num_k),
        in_specs=[
            # Q's block index does not depend on k -> stays resident in VMEM.
            pl.BlockSpec((1, N, D), lambda b, k: (b, 0, 0)),
            pl.BlockSpec((1, block_k, D), lambda b, k: (b, k, 0)),
            pl.BlockSpec((1, block_k, E), lambda b, k: (b, k, 0)),
        ],
        out_specs=pl.BlockSpec((1, N, E), lambda b, k: (b, 0, 0)),
        scratch_shapes=[
            pltpu.VMEM((D, E), jnp.float32),   # KV accumulator
            pltpu.VMEM((1, D), jnp.float32),   # K_sum accumulator
        ],
        compiler_params=pltpu.CompilerParams(
            dimension_semantics=("parallel", "arbitrary")),
    )(Q, K, V)


def _reference(Q, K, V, eps=1e-6):
    # Pure-JAX reference of the PyTorch forward (eval mode).
    Qp = _phi(Q.astype(jnp.float32))
    Kp = _phi(K.astype(jnp.float32))
    Ksum = Kp.sum(axis=1)
    Z = jnp.einsum('bnd,bd->bn', Qp, Ksum,
                   precision=jax.lax.Precision.HIGHEST) + eps
    KV = jnp.einsum('bnd,bne->bde', Kp, V.astype(jnp.float32),
                    precision=jax.lax.Precision.HIGHEST)
    ctx = jnp.einsum('bnd,bde->bne', Qp, KV,
                     precision=jax.lax.Precision.HIGHEST)
    return ctx / Z[..., None]


if __name__ == "__main__":
    key = jax.random.PRNGKey(0)
    B, N, D = 2, 16, 32      # batch, seq, embed_dim (V feature dim == D)

    kq, kk, kv = jax.random.split(key, 3)
    Q = jax.random.normal(kq, (B, N, D), dtype=jnp.float32)
    K = jax.random.normal(kk, (B, N, D), dtype=jnp.float32)
    V = jax.random.normal(kv, (B, N, D), dtype=jnp.float32)

    # block_k=8 -> two reduction steps, exercising the accumulator init/update path.
    out = linear_attention_forward(Q, K, V, eps=1e-6, block_k=8)
    out = jax.block_until_ready(out)

    ref = _reference(Q, K, V, eps=1e-6)
    assert out.shape == (B, N, D)
    assert jnp.allclose(out, ref, atol=1e-4, rtol=1e-4), "mismatch vs reference"

    print("KERNEL_OK")
</pallas_src>

<mosaic_0001>
module attributes {stable_mosaic.version = 11 : i64} {
  func.func @_linear_attention_kernel(%arg0: i32, %arg1: i32, %arg2: memref<1x16x32xf32, #tpu.memory_space<vmem>>, %arg3: memref<1x8x32xf32, #tpu.memory_space<vmem>>, %arg4: memref<1x8x32xf32, #tpu.memory_space<vmem>>, %arg5: memref<1x16x32xf32, #tpu.memory_space<vmem>>, %arg6: memref<32x32xf32, #tpu.memory_space<vmem>>, %arg7: memref<1x32xf32, #tpu.memory_space<vmem>>) attributes {dimension_semantics = [#tpu.dimension_semantics<parallel>, #tpu.dimension_semantics<arbitrary>], iteration_bounds = array<i64: 2, 2>, scalar_prefetch = 0 : i64, scratch_operands = 2 : i64, tpu.core_type = #tpu.core_type<tc>, window_params = [{transform_indices = @transform_0, window_bounds = array<i64: 1, 16, 32>}, {transform_indices = @transform_1, window_bounds = array<i64: 1, 8, 32>}, {transform_indices = @transform_2, window_bounds = array<i64: 1, 8, 32>}, {transform_indices = @transform_3, window_bounds = array<i64: 1, 16, 32>}]} {
    %c0_i32 = arith.constant 0 : i32
    %0 = arith.cmpi eq, %arg1, %c0_i32 : i32
    %1 = arith.extui %0 : i1 to i32
    %c0_i32_0 = arith.constant 0 : i32
    %2 = arith.cmpi ne, %1, %c0_i32_0 : i32
    scf.if %2 {
      %cst_18 = arith.constant 0.000000e+00 : f32
      %26 = vector.broadcast %cst_18 : f32 to vector<32x32xf32>
      %c0_19 = arith.constant 0 : index
      %c0_20 = arith.constant 0 : index
      %27 = vector.load %arg6[%c0_19, %c0_20] : memref<32x32xf32, #tpu.memory_space<vmem>>, vector<32x32xf32>
      tpu.vector_store %arg6[%c0_19, %c0_20], %26 {strides = array<i32>} : memref<32x32xf32, #tpu.memory_space<vmem>>, vector<32x32xf32>,
      %cst_21 = arith.constant 0.000000e+00 : f32
      %28 = vector.broadcast %cst_21 : f32 to vector<1x32xf32>
      %c0_22 = arith.constant 0 : index
      %c0_23 = arith.constant 0 : index
      %29 = vector.load %arg7[%c0_22, %c0_23] : memref<1x32xf32, #tpu.memory_space<vmem>>, vector<1x32xf32>
      tpu.vector_store %arg7[%c0_22, %c0_23], %28 {strides = array<i32>} : memref<1x32xf32, #tpu.memory_space<vmem>>, vector<1x32xf32>,
    } else {
    }
    %c0 = arith.constant 0 : index
    %c0_1 = arith.constant 0 : index
    %c0_2 = arith.constant 0 : index
    %3 = vector.load %arg3[%c0, %c0_1, %c0_2] : memref<1x8x32xf32, #tpu.memory_space<vmem>>, vector<1x8x32xf32>
    %4 = vector.shape_cast %3 : vector<1x8x32xf32> to vector<8x32xf32>
    %c0_3 = arith.constant 0 : index
    %c0_4 = arith.constant 0 : index
    %c0_5 = arith.constant 0 : index
    %5 = vector.load %arg4[%c0_3, %c0_4, %c0_5] : memref<1x8x32xf32, #tpu.memory_space<vmem>>, vector<1x8x32xf32>
    %6 = vector.shape_cast %5 : vector<1x8x32xf32> to vector<8x32xf32>
    %cst = arith.constant 0.000000e+00 : f32
    %7 = vector.broadcast %cst : f32 to vector<8x32xf32>
    %8 = arith.cmpf ogt, %4, %7 : vector<8x32xf32>
    %cst_6 = arith.constant 1.000000e+00 : f32
    %9 = vector.broadcast %cst_6 : f32 to vector<8x32xf32>
    %10 = arith.addf %4, %9 : vector<8x32xf32>
    %11 = math.exp %4 : vector<8x32xf32>
    %12 = arith.select %8, %10, %11 : vector<8x32xi1>, vector<8x32xf32>
    %c0_7 = arith.constant 0 : index
    %c0_8 = arith.constant 0 : index
    %13 = vector.load %arg6[%c0_7, %c0_8] : memref<32x32xf32, #tpu.memory_space<vmem>>, vector<32x32xf32>
    %14 = tpu.transpose %12, [1, 0] : vector<8x32xf32> -> vector<32x8xf32>
    %cst_9 = arith.constant dense<0.000000e+00> : vector<32x32xf32>
    %15 = tpu.matmul %14, %6, %cst_9 {dimension_numbers = #tpu.dot_dimension_numbers<[1], [0], [0], [1], [0, 0, 1, 1], [], []>, precision = #tpu.contract_precision<fp32>} : vector<32x8xf32>, vector<8x32xf32>, vector<32x32xf32> -> vector<32x32xf32>
    %16 = arith.addf %13, %15 : vector<32x32xf32>
    %c0_10 = arith.constant 0 : index
    %c0_11 = arith.constant 0 : index
    %17 = vector.load %arg6[%c0_10, %c0_11] : memref<32x32xf32, #tpu.memory_space<vmem>>, vector<32x32xf32>
    tpu.vector_store %arg6[%c0_10, %c0_11], %16 {strides = array<i32>} : memref<32x32xf32, #tpu.memory_space<vmem>>, vector<32x32xf32>,
    %c0_12 = arith.constant 0 : index
    %c0_13 = arith.constant 0 : index
    %18 = vector.load %arg7[%c0_12, %c0_13] : memref<1x32xf32, #tpu.memory_space<vmem>>, vector<1x32xf32>
    %cst_14 = arith.constant dense<0.000000e+00> : vector<32xf32>
    %19 = vector.multi_reduction <add>, %12, %cst_14 [0] : vector<8x32xf32> to vector<32xf32>
    %20 = vector.shape_cast %19 : vector<32xf32> to vector<1x32xf32>
    %21 = arith.addf %18, %20 : vector<1x32xf32>
    %c0_15 = arith.constant 0 : index
    %c0_16 = arith.constant 0 : index
    %22 = vector.load %arg7[%c0_15, %c0_16] : memref<1x32xf32, #tpu.memory_space<vmem>>, vector<1x32xf32>
    tpu.vector_store %arg7[%c0_15, %c0_16], %21 {strides = array<i32>} : memref<1x32xf32, #tpu.memory_space<vmem>>, vector<1x32xf32>,
    %c1_i32 = arith.constant 1 : i32
    %23 = arith.cmpi eq, %arg1, %c1_i32 : i32
    %24 = arith.extui %23 : i1 to i32
    %c0_i32_17 = arith.constant 0 : i32
    %25 = arith.cmpi ne, %24, %c0_i32_17 : i32
    scf.if %25 {
      %c0_18 = arith.constant 0 : index
      %c0_19 = arith.constant 0 : index
      %c0_20 = arith.constant 0 : index
      %26 = vector.load %arg2[%c0_18, %c0_19, %c0_20] : memref<1x16x32xf32, #tpu.memory_space<vmem>>, vector<1x16x32xf32>
      %27 = vector.shape_cast %26 : vector<1x16x32xf32> to vector<16x32xf32>
      %cst_21 = arith.constant 0.000000e+00 : f32
      %28 = vector.broadcast %cst_21 : f32 to vector<16x32xf32>
      %29 = arith.cmpf ogt, %27, %28 : vector<16x32xf32>
      %cst_22 = arith.constant 1.000000e+00 : f32
      %30 = vector.broadcast %cst_22 : f32 to vector<16x32xf32>
      %31 = arith.addf %27, %30 : vector<16x32xf32>
      %32 = math.exp %27 : vector<16x32xf32>
      %33 = arith.select %29, %31, %32 : vector<16x32xi1>, vector<16x32xf32>
      %c0_23 = arith.constant 0 : index
      %c0_24 = arith.constant 0 : index
      %34 = vector.load %arg7[%c0_23, %c0_24] : memref<1x32xf32, #tpu.memory_space<vmem>>, vector<1x32xf32>
      %35 = vector.broadcast %34 : vector<1x32xf32> to vector<16x32xf32>
      %36 = arith.mulf %33, %35 : vector<16x32xf32>
      %cst_25 = arith.constant dense<0.000000e+00> : vector<16xf32>
      %37 = vector.multi_reduction <add>, %36, %cst_25 [1] : vector<16x32xf32> to vector<16xf32>
      %38 = vector.shape_cast %37 : vector<16xf32> to vector<16x1xf32>
      %cst_26 = arith.constant 9.99999997E-7 : f32
      %39 = vector.broadcast %cst_26 : f32 to vector<16x1xf32>
      %40 = arith.addf %38, %39 : vector<16x1xf32>
      %c0_27 = arith.constant 0 : index
      %c0_28 = arith.constant 0 : index
      %41 = vector.load %arg6[%c0_27, %c0_28] : memref<32x32xf32, #tpu.memory_space<vmem>>, vector<32x32xf32>
      %cst_29 = arith.constant dense<0.000000e+00> : vector<16x32xf32>
      %42 = tpu.matmul %33, %41, %cst_29 {dimension_numbers = #tpu.dot_dimension_numbers<[1], [0], [0], [1], [0, 0, 1, 1], [], []>, precision = #tpu.contract_precision<fp32>} : vector<16x32xf32>, vector<32x32xf32>, vector<16x32xf32> -> vector<16x32xf32>
      %43 = vector.broadcast %40 : vector<16x1xf32> to vector<16x32xf32>
      %44 = arith.divf %42, %43 : vector<16x32xf32>
      %c0_30 = arith.constant 0 : index
      %c0_31 = arith.constant 0 : index
      %c0_32 = arith.constant 0 : index
      %45 = vector.load %arg5[%c0_30, %c0_31, %c0_32] : memref<1x16x32xf32, #tpu.memory_space<vmem>>, vector<1x16x32xf32>
      %46 = vector.shape_cast %45 : vector<1x16x32xf32> to vector<16x32xf32>
      %47 = vector.shape_cast %44 : vector<16x32xf32> to vector<1x16x32xf32>
      tpu.vector_store %arg5[%c0_30, %c0_31, %c0_32], %47 {strides = array<i32>} : memref<1x16x32xf32, #tpu.memory_space<vmem>>, vector<1x16x32xf32>,
    } else {
    }
    return
  }
  func.func @transform_0(%arg0: i32, %arg1: i32) -> (i32, i32, i32) {
    %c0_i32 = arith.constant 0 : i32
    %c0_i32_0 = arith.constant 0 : i32
    %c0_i32_1 = arith.constant 0 : i32
    return %arg0, %c0_i32, %c0_i32_0 : i32, i32, i32
  }
  func.func @transform_1(%arg0: i32, %arg1: i32) -> (i32, i32, i32) {
    %c0_i32 = arith.constant 0 : i32
    %c0_i32_0 = arith.constant 0 : i32
    return %arg0, %arg1, %c0_i32 : i32, i32, i32
  }
  func.func @transform_2(%arg0: i32, %arg1: i32) -> (i32, i32, i32) {
    %c0_i32 = arith.constant 0 : i32
    %c0_i32_0 = arith.constant 0 : i32
    return %arg0, %arg1, %c0_i32 : i32, i32, i32
  }
  func.func @transform_3(%arg0: i32, %arg1: i32) -> (i32, i32, i32) {
    %c0_i32 = arith.constant 0 : i32
    %c0_i32_0 = arith.constant 0 : i32
    %c0_i32_1 = arith.constant 0 : i32
    return %arg0, %c0_i32, %c0_i32_0 : i32, i32, i32
  }
}

</mosaic_0001>

<llo_original>
// kernel: tpu_custom_call.1
$region0: #{tpu_custom_call.1}
  #allocation0 [shape = 'u32[]', space=smem, size = 0x4, offset = 0x4, fixed_abs, tag = 'smem constant byte address 0x4 - core index']
  #allocation1 [shape = 'u32[144,128]{1,0:T(1,128)}', space=vmem, size = 0x12000, scoped, tag = 'internal scratch']
  #allocation2 [shape = 'f32[32,32]{1,0:T(8,128)}', space=vmem, size = 0x4000, scoped, tag = 'scratch operand']
  #allocation3 [shape = 'f32[1,32]{1,0:T(1,128)}', space=vmem, size = 0x200, scoped, tag = 'scratch operand']
  %s0 = inlined_call_operand.hbm [shape: f32[2,16,32], index: 0, kind: input, shape index: {}]
  %s1 = inlined_call_operand.hbm [shape: f32[2,16,32], index: 1, kind: input, shape index: {}]
  %s2 = inlined_call_operand.hbm [shape: f32[2,16,32], index: 2, kind: input, shape index: {}]
  %s3 = inlined_call_operand.hbm [shape: f32[2,16,32], index: 3, kind: output, shape index: {}]
  %s4 = sld [smem:[#allocation0]]
  $region65: #{tpu_custom_call.1} parent=0
    _
  %s6 = ssub.s32 1, %s4
  %s7 = scalar_select 0, %s6, %s4
  $region1: #{tpu_custom_call.1} parent=0
    #allocation4 [shape = 'u8[16384]{0}', space=vmem, size = 0x4000, scoped, tag = 'input window, operand 0']
    #allocation5 [shape = 's32[2]{0}', space=sflag, size = 0x8, scoped, tag = 'scoped memory for tpu_custom_call.1']
    #allocation6 [shape = 's32[2]{0}', space=sflag, size = 0x8, scoped, tag = 'scoped memory for tpu_custom_call.1']
    #allocation7 [shape = 'u8[8192]{0}', space=vmem, size = 0x2000, scoped, tag = 'input window, operand 1']
    #allocation8 [shape = 's32[2]{0}', space=sflag, size = 0x8, scoped, tag = 'scoped memory for tpu_custom_call.1']
    #allocation9 [shape = 'u8[8192]{0}', space=vmem, size = 0x2000, scoped, tag = 'input window, operand 2']
    #allocation10 [shape = 'u8[16384]{0}', space=vmem, size = 0x4000, scoped, tag = 'output window, operand 0']
    %8 = vsyncpa [#allocation5], 0
    %s9 = scalar_lea.sflag [#allocation5], 1
    %10 = vsyncpa %s9, 0
    %11 = vsyncpa [#allocation8], 0
    %s12 = scalar_lea.sflag [#allocation8], 1
    %13 = vsyncpa %s12, 0
    %14 = vsyncpa [#allocation6], 0
    %s15 = scalar_lea.sflag [#allocation6], 1
    %16 = vsyncpa %s15, 0
    loop: start=0, step=1, limit=6
    $region2: #{tpu_custom_call.1} parent=1 // loop_pre_header
      _
    $region3: #{tpu_custom_call.1} parent=1 // loop_header
      %s18 = sphi 0, %s22
      %p19 = scmp.ge.s32.totalorder %s18, 6
      %s25 = sphi 0, %s37
      %s26 = sphi 0, %s33
      %s27 = sphi 0, %s25
      %s28 = sphi 0, %s26
      %s29 = sphi 0, %s27
      %s30 = sphi 0, %s28
      %s40 = sphi 0, %s42
      %s43 = sphi 0, %s40
      %s44 = sphi 0, %s43
      %s60 = sphi 0, %s44
      %s68 = sphi 0, %s70
      %s71 = sphi 0, %s68
      %s72 = sphi 0, %s71
      %s88 = sphi 0, %s72
      %s96 = sphi 0, %s98
      %s99 = sphi 0, %s96
      %s100 = sphi 0, %s99
      %s116 = sphi 0, %s100
      %s122 = sphi 0, %s124
      %s125 = sphi 0, %s122
      %s126 = sphi 0, %s125
      %s142 = sphi 0, %s126
    $region4: #{tpu_custom_call.1} parent=1 // loop_header_branch
      %21 = sbr.rel (%p19) target = $region8
    $region5: #{tpu_custom_call.1} parent=1 // loop_body
      %s23 = ssub.s32 %s18, 1
      %s24 = ssub.s32 %s18, 2
      %s31 = sadd.s32 1, %s26
      %p32 = scmp.ge.s32.totalorder %s31, 2
      %s33 = scalar_select %p32, 0, %s31
      %s34 = sadd.s32 1, %s25
      %s35 = scalar_select %p32, %s34, %s25
      %p36 = scmp.ge.s32.totalorder %s35, 2
      %s37 = scalar_select %p36, 0, %s35
      %s38 = ssub.s32 %s25, %s37
      %p39 = scmp.eq.s32.totalorder %s38, 0
      %s41 = sadd.s32 %s40, 1
      %s42 = scalar_select %p39, %s40, %s41
      %p45 = pneg %p39
      %p46 = scmp.eq.s32.totalorder %s18, 3
      %p47 = por %p45, %p46
      %p48 = scmp.ne.s32.totalorder %s40, %s43
      %p49 = scmp.eq.s32.totalorder %s18, 0
      %p50 = por %p48, %p49
      %p51 = scmp.ne.s32.totalorder %s40, %s43
      %p52 = scmp.eq.s32.totalorder %s23, 3
      %p53 = por %p51, %p52
      %p54 = scmp.ne.s32.totalorder %s43, %s44
      %p55 = scmp.eq.s32.totalorder %s23, 0
      %p56 = por %p54, %p55
      %p57 = scmp.ne.s32.totalorder %s43, %s44
      %p58 = scmp.eq.s32.totalorder %s24, 3
      %p59 = por %p57, %p58
      %p61 = scmp.ne.s32.totalorder %s44, %s60
      %p62 = scmp.eq.s32.totalorder %s24, 0
      %p63 = por %p61, %p62
      %s64 = ssub.s32 %s25, %s37
      %s65 = ssub.s32 %s26, %s33
      %s66 = sor.u32 %s64, %s65
      %p67 = scmp.eq.s32.totalorder %s66, 0
      %s69 = sadd.s32 %s68, 1
      %s70 = scalar_select %p67, %s68, %s69
      %p73 = pneg %p67
      %p74 = scmp.eq.s32.totalorder %s18, 3
      %p75 = por %p73, %p74
      %p76 = scmp.ne.s32.totalorder %s68, %s71
      %p77 = scmp.eq.s32.totalorder %s18, 0
      %p78 = por %p76, %p77
      %p79 = scmp.ne.s32.totalorder %s68, %s71
      %p80 = scmp.eq.s32.totalorder %s23, 3
      %p81 = por %p79, %p80
      %p82 = scmp.ne.s32.totalorder %s71, %s72
      %p83 = scmp.eq.s32.totalorder %s23, 0
      %p84 = por %p82, %p83
      %p85 = scmp.ne.s32.totalorder %s71, %s72
      %p86 = scmp.eq.s32.totalorder %s24, 3
      %p87 = por %p85, %p86
      %p89 = scmp.ne.s32.totalorder %s72, %s88
      %p90 = scmp.eq.s32.totalorder %s24, 0
      %p91 = por %p89, %p90
      %s92 = ssub.s32 %s25, %s37
      %s93 = ssub.s32 %s26, %s33
      %s94 = sor.u32 %s92, %s93
      %p95 = scmp.eq.s32.totalorder %s94, 0
      %s97 = sadd.s32 %s96, 1
      %s98 = scalar_select %p95, %s96, %s97
      %p101 = pneg %p95
      %p102 = scmp.eq.s32.totalorder %s18, 3
      %p103 = por %p101, %p102
      %p104 = scmp.ne.s32.totalorder %s96, %s99
      %p105 = scmp.eq.s32.totalorder %s18, 0
      %p106 = por %p104, %p105
      %p107 = scmp.ne.s32.totalorder %s96, %s99
      %p108 = scmp.eq.s32.totalorder %s23, 3
      %p109 = por %p107, %p108
      %p110 = scmp.ne.s32.totalorder %s99, %s100
      %p111 = scmp.eq.s32.totalorder %s23, 0
      %p112 = por %p110, %p111
      %p113 = scmp.ne.s32.totalorder %s99, %s100
      %p114 = scmp.eq.s32.totalorder %s24, 3
      %p115 = por %p113, %p114
      %p117 = scmp.ne.s32.totalorder %s100, %s116
      %p118 = scmp.eq.s32.totalorder %s24, 0
      %p119 = por %p117, %p118
      %s120 = ssub.s32 %s25, %s37
      %p121 = scmp.eq.s32.totalorder %s120, 0
      %s123 = sadd.s32 %s122, 1
      %s124 = scalar_select %p121, %s122, %s123
      %p127 = pneg %p121
      %p128 = scmp.eq.s32.totalorder %s18, 3
      %p129 = por %p127, %p128
      %p130 = scmp.ne.s32.totalorder %s122, %s125
      %p131 = scmp.eq.s32.totalorder %s18, 0
      %p132 = por %p130, %p131
      %p133 = scmp.ne.s32.totalorder %s122, %s125
      %p134 = scmp.eq.s32.totalorder %s23, 3
      %p135 = por %p133, %p134
      %p136 = scmp.ne.s32.totalorder %s125, %s126
      %p137 = scmp.eq.s32.totalorder %s23, 0
      %p138 = por %p136, %p137
      %p139 = scmp.ne.s32.totalorder %s125, %s126
      %p140 = scmp.eq.s32.totalorder %s24, 3
      %p141 = por %p139, %p140
      %p143 = scmp.ne.s32.totalorder %s126, %s142
      %p144 = scmp.eq.s32.totalorder %s24, 0
      %p145 = por %p143, %p144
      %p146 = scmp.le.s32.totalorder 1, %s18
      %p147 = scmp.lt.s32.totalorder %s18, 5
      %p148 = pnand %p146, %p147
      %p149 = pneg %p148
      // Predicated region
      $region9: #{tpu_custom_call.1} parent=5 // pred_check
        _
      $region10: #{tpu_custom_call.1} parent=5 // pred_check_branch
        %151 = sbr.rel (%p148) target = $region12
      $region11: #{tpu_custom_call.1} parent=5 // pred_region
        %s152 = ssub.s32 %s18, 1
      $region12: #{tpu_custom_call.1} parent=5 // pred_fallthru
        _
      %p153 = scmp.lt.s32.totalorder %s18, 4
      // Predicated region
      $region13: #{tpu_custom_call.1} parent=5 // pred_check
        %p154 = pneg %p153
      $region14: #{tpu_custom_call.1} parent=5 // pred_check_branch
        %156 = sbr.rel (%p154) target = $region16
      $region15: #{tpu_custom_call.1} parent=5 // pred_region
        // Predicated region
        $region17: #{tpu_custom_call.1} parent=15 // pred_check
          %p157 = pneg %p50
        $region18: #{tpu_custom_call.1} parent=15 // pred_check_branch
          %159 = sbr.rel (%p157) target = $region20
        $region19: #{tpu_custom_call.1} parent=15 // pred_region
          %s160 = sand.u32 %s40, 1
          %s161 = scalar_lea.sflag [#allocation5], %s160
          %s162 = sand.u32 %s40, 1
          %s163 = smul.addr %s162, 16
          %s164 = scalar_lea.vmem [#allocation4], %s163
          %s166 = ssub.s32 256, 256
          %167 = vsyncadd %s161, %s166
          %s168 = smul.addr %s25, 2
          %s169 = smul.addr %s168, 128
          %s170 = scalar_lea.hbm %s0, %s169
          %s171 = sshll.u32 %s164, 4
          %s172 = int_to_ptr.vmem [resolvable:$true] %s171
          %177 = dma.hbm_to_vmem [thread:$0]  %s170, 256, %s172, %s161, 128, 128, 8
        $region20: #{tpu_custom_call.1} parent=15 // pred_fallthru
          _
        // Predicated region
        $region21: #{tpu_custom_call.1} parent=15 // pred_check
          %p178 = pneg %p78
        $region22: #{tpu_custom_call.1} parent=15 // pred_check_branch
          %180 = sbr.rel (%p178) target = $region24
        $region23: #{tpu_custom_call.1} parent=15 // pred_region
          %s181 = sand.u32 %s18, 1
          %s182 = scalar_lea.sflag [#allocation8], %s181
          %s183 = sand.u32 %s68, 1
          %s184 = smul.addr %s183, 8
          %s185 = scalar_lea.vmem [#allocation7], %s184
          %s187 = ssub.s32 128, 128
          %188 = vsyncadd %s182, %s187
          %s189 = smul.addr %s25, 2
          %s190 = sadd.s32 %s26, %s189
          %s191 = smul.addr %s190, 128
          %s192 = scalar_lea.hbm %s1, %s191
          %s194 = sshll.u32 %s185, 4
          %s195 = int_to_ptr.vmem [resolvable:$true] %s194
          %197 = dma.hbm_to_vmem [thread:$0]  %s192, 128, %s195, %s182
        $region24: #{tpu_custom_call.1} parent=15 // pred_fallthru
          _
        // Predicated region
        $region25: #{tpu_custom_call.1} parent=15 // pred_check
          %p198 = pneg %p106
        $region26: #{tpu_custom_call.1} parent=15 // pred_check_branch
          %200 = sbr.rel (%p198) target = $region28
        $region27: #{tpu_custom_call.1} parent=15 // pred_region
          %s201 = sand.u32 %s18, 1
          %s202 = scalar_lea.sflag [#allocation8], %s201
          %s203 = sand.u32 %s96, 1
          %s204 = smul.addr %s203, 8
          %s205 = scalar_lea.vmem [#allocation9], %s204
          %s207 = ssub.s32 128, 128
          %208 = vsyncadd %s202, %s207
          %s209 = smul.addr %s25, 2
          %s210 = sadd.s32 %s26, %s209
          %s211 = smul.addr %s210, 128
          %s212 = scalar_lea.hbm %s2, %s211
          %s214 = sshll.u32 %s205, 4
          %s215 = int_to_ptr.vmem [resolvable:$true] %s214
          %217 = dma.hbm_to_vmem [thread:$0]  %s212, 128, %s215, %s202
        $region28: #{tpu_custom_call.1} parent=15 // pred_fallthru
          _
      $region16: #{tpu_custom_call.1} parent=5 // pred_fallthru
        _
      %p218 = scmp.le.s32.totalorder 1, %s18
      %p219 = scmp.lt.s32.totalorder %s18, 5
      %p220 = pnand %p218, %p219
      %p221 = pneg %p220
      // Predicated region
      $region29: #{tpu_custom_call.1} parent=5 // pred_check
        _
      $region30: #{tpu_custom_call.1} parent=5 // pred_check_branch
        %223 = sbr.rel (%p220) target = $region32
      $region31: #{tpu_custom_call.1} parent=5 // pred_region
        %s224 = ssub.s32 %s18, 1
        %s225 = sand.u32 %s43, 1
        %s226 = scalar_lea.sflag [#allocation5], %s225
        %s227 = sand.u32 %s43, 1
        %s228 = smul.addr %s227, 16
        %s229 = scalar_lea.vmem [#allocation4], %s228
        // Predicated region
        $region33: #{tpu_custom_call.1} parent=31 // pred_check
          %p230 = pneg %p56
        $region34: #{tpu_custom_call.1} parent=31 // pred_check_branch
          %232 = sbr.rel (%p230) target = $region36
        $region35: #{tpu_custom_call.1} parent=31 // pred_region
          %233 = dma.done %s226, 256
        $region36: #{tpu_custom_call.1} parent=31 // pred_fallthru
          _
        %s234 = sand.u32 %s23, 1
        %s235 = scalar_lea.sflag [#allocation8], %s234
        %s236 = sand.u32 %s71, 1
        %s237 = smul.addr %s236, 8
        %s238 = scalar_lea.vmem [#allocation7], %s237
        // Predicated region
        $region37: #{tpu_custom_call.1} parent=31 // pred_check
          %p239 = pneg %p84
        $region38: #{tpu_custom_call.1} parent=31 // pred_check_branch
          %241 = sbr.rel (%p239) target = $region40
        $region39: #{tpu_custom_call.1} parent=31 // pred_region
          %242 = dma.done %s235, 128
        $region40: #{tpu_custom_call.1} parent=31 // pred_fallthru
          _
        %s243 = sand.u32 %s23, 1
        %s244 = scalar_lea.sflag [#allocation8], %s243
        %s245 = sand.u32 %s99, 1
        %s246 = smul.addr %s245, 8
        %s247 = scalar_lea.vmem [#allocation9], %s246
        // Predicated region
        $region41: #{tpu_custom_call.1} parent=31 // pred_check
          %p248 = pneg %p112
        $region42: #{tpu_custom_call.1} parent=31 // pred_check_branch
          %250 = sbr.rel (%p248) target = $region44
        $region43: #{tpu_custom_call.1} parent=31 // pred_region
          %251 = dma.done %s244, 128
        $region44: #{tpu_custom_call.1} parent=31 // pred_fallthru
          _
        %s252 = sand.u32 %s43, 1
        %s253 = scalar_lea.sflag [#allocation5], %s252
        %s254 = sand.u32 %s43, 1
        %s255 = smul.addr %s254, 16
        %s256 = scalar_lea.vmem [#allocation4], %s255
        %p257 = pneg %p56
        %p258 = pneg %p53
        %s259 = sand.u32 %s23, 1
        %s260 = scalar_lea.sflag [#allocation8], %s259
        %s261 = sand.u32 %s71, 1
        %s262 = smul.addr %s261, 8
        %s263 = scalar_lea.vmem [#allocation7], %s262
        %p264 = pneg %p84
        %p265 = pneg %p81
        %s266 = sand.u32 %s23, 1
        %s267 = scalar_lea.sflag [#allocation8], %s266
        %s268 = sand.u32 %s99, 1
        %s269 = smul.addr %s268, 8
        %s270 = scalar_lea.vmem [#allocation9], %s269
        %p271 = pneg %p112
        %p272 = pneg %p109
        %p273 = pneg %p138
        %p274 = pneg %p135
        %s275 = sand.u32 %s125, 1
        %s276 = scalar_lea.sflag [#allocation6], %s275
        %s277 = sand.u32 %s125, 1
        %s278 = smul.addr %s277, 16
        %s279 = scalar_lea.vmem [#allocation10], %s278
        %p280 = scmp.eq.s32.totalorder %s28, 0
        // Predicated region
        $region45: #{tpu_custom_call.1} parent=31 // pred_check
          %p281 = pneg %p280
        $region46: #{tpu_custom_call.1} parent=31 // pred_check_branch
          %283 = sbr.rel (%p281) target = $region48
        $region47: #{tpu_custom_call.1} parent=31 // pred_region
          %vm284 = vcmask 261120
          %285 = vst.msk [vmem:[#allocation2] sm:$0xff] %vm284, 0.0
          %286 = vst.msk [vmem:[#allocation2 + $0x8] sm:$0xff] %vm284, 0.0
          %287 = vst.msk [vmem:[#allocation2 + $0x10] sm:$0xff] %vm284, 0.0
          %288 = vst.msk [vmem:[#allocation2 + $0x18] sm:$0xff] %vm284, 0.0
          %vm289 = vcmask 253952
          %290 = vst.msk [vmem:[#allocation3] sm:$0x1] %vm289, 0.0
        $region48: #{tpu_custom_call.1} parent=31 // pred_fallthru
          _
        %v291 = vld [vmem:[%s238] sm:$0xff]
        %v292 = vld [vmem:[%s247] sm:$0xff]
        %vm293 = vcmp.gt.f32.partialorder %v291, 0.0
        %v294 = vadd.f32 %v291, 1.0
        %v295 = vmul.f32 %v291, 1.442695
        %v296 = vpow.pop %v295
        %v297 = vsel %vm293, %v294, %v296
        %v298 = vld [vmem:[#allocation2] sm:$0xff]
        %v299 = vld [vmem:[#allocation2 + $0x8] sm:$0xff]
        %v300 = vld [vmem:[#allocation2 + $0x10] sm:$0xff]
        %v301 = vld [vmem:[#allocation2 + $0x18] sm:$0xff]
        %302 = vxpose.xlu0.b32.start [1/16] %v297, 128
        %303 = vxpose.xlu0.b32.cont [2/16] 0.0, 128
        %304 = vxpose.xlu0.b32.cont [3/16] 0.0, 128
        %305 = vxpose.xlu0.b32.cont [4/16] 0.0, 128
        %306 = vxpose.xlu0.b32.cont [5/16] 0.0, 128
        %307 = vxpose.xlu0.b32.cont [6/16] 0.0, 128
        %308 = vxpose.xlu0.b32.cont [7/16] 0.0, 128
        %309 = vxpose.xlu0.b32.cont [8/16] 0.0, 128
        %310 = vxpose.xlu0.b32.cont [9/16] 0.0, 128
        %311 = vxpose.xlu0.b32.cont [10/16] 0.0, 128
        %312 = vxpose.xlu0.b32.cont [11/16] 0.0, 128
        %313 = vxpose.xlu0.b32.cont [12/16] 0.0, 128
        %314 = vxpose.xlu0.b32.cont [13/16] 0.0, 128
        %315 = vxpose.xlu0.b32.cont [14/16] 0.0, 128
        %316 = vxpose.xlu0.b32.cont [15/16] 0.0, 128
        %317 = vxpose.xlu0.b32.end [16/16] 0.0, 128
        %v318 = vpop.trf.xlu0
        %v319 = vpop.trf.xlu0
        %v320 = vpop.trf.xlu0
        %v321 = vpop.trf.xlu0
        %v322 = vpop.trf.xlu0
        %v323 = vpop.trf.xlu0
        %v324 = vpop.trf.xlu0
        %v325 = vpop.trf.xlu0
        %v326 = vpop.trf.xlu0
        %v327 = vpop.trf.xlu0
        %v328 = vpop.trf.xlu0
        %v329 = vpop.trf.xlu0
        %v330 = vpop.trf.xlu0
        %v331 = vpop.trf.xlu0
        %v332 = vpop.trf.xlu0
        %v333 = vpop.trf.xlu0
        %vm334 = vcmask 64512
        %v336 = vsel %vm334, %v318, 0
        %v339 = vsel %vm334, %v319, 0
        %v342 = vsel %vm334, %v320, 0
        %v345 = vsel %vm334, %v321, 0
        %347 = vmatprep.subr.mxu0 0.0
        %v348 = vand.u32 %v292, 4294901760
        %349 = vmatpush1.msra.mxu0 %v348
        %350 = vmatprep.subr.mxu0 0.0
        %351 = vmatpush1.msra.mxu0 0.0
        %352 = vmatprep.subr.mxu0 0.0
        %353 = vmatpush1.msra.mxu0 0.0
        %354 = vmatprep.subr.mxu0 0.0
        %355 = vmatpush1.msra.mxu0 0.0
        %356 = vmatprep.subr.mxu0 0.0
        %357 = vmatpush1.msra.mxu0 0.0
        %358 = vmatprep.subr.mxu0 0.0
        %359 = vmatpush1.msra.mxu0 0.0
        %360 = vmatprep.subr.mxu0 0.0
        %361 = vmatpush1.msra.mxu0 0.0
        %362 = vmatprep.subr.mxu0 0.0
        %363 = vmatpush1.msra.mxu0 0.0
        %364 = vmatprep.subr.mxu0 0.0
        %365 = vmatpush1.msra.mxu0 0.0
        %366 = vmatprep.subr.mxu0 0.0
        %367 = vmatpush1.msra.mxu0 0.0
        %368 = vmatprep.subr.mxu0 0.0
        %369 = vmatpush1.msra.mxu0 0.0
        %370 = vmatprep.subr.mxu0 0.0
        %371 = vmatpush1.msra.mxu0 0.0
        %372 = vmatprep.subr.mxu0 0.0
        %373 = vmatpush1.msra.mxu0 0.0
        %374 = vmatprep.subr.mxu0 0.0
        %375 = vmatpush1.msra.mxu0 0.0
        %376 = vmatprep.subr.mxu0 0.0
        %377 = vmatpush1.msra.mxu0 0.0
        %378 = vmatprep.subr.mxu0 0.0
        %379 = vmatpush1.msra.mxu0 0.0
        %380 = vmatprep.subr.mxu0 0.0
        %381 = vmatpush1.msra.mxu0 0.0
        %382 = vmatprep.subr.mxu0 0.0
        %383 = vmatpush1.msra.mxu0 0.0
        %384 = vmatprep.subr.mxu0 0.0
        %385 = vmatpush1.msra.mxu0 0.0
        %386 = vmatprep.subr.mxu0 0.0
        %387 = vmatpush1.msra.mxu0 0.0
        %388 = vmatprep.subr.mxu0 0.0
        %389 = vmatpush1.msra.mxu0 0.0
        %390 = vmatprep.subr.mxu0 0.0
        %391 = vmatpush1.msra.mxu0 0.0
        %392 = vmatprep.subr.mxu0 0.0
        %393 = vmatpush1.msra.mxu0 0.0
        %394 = vmatprep.subr.mxu0 0.0
        %395 = vmatpush1.msra.mxu0 0.0
        %396 = vmatprep.subr.mxu0 0.0
        %397 = vmatpush1.msra.mxu0 0.0
        %398 = vmatprep.subr.mxu0 0.0
        %399 = vmatpush1.msra.mxu0 0.0
        %400 = vmatprep.subr.mxu0 0.0
        %401 = vmatpush1.msra.mxu0 0.0
        %402 = vmatprep.subr.mxu0 0.0
        %403 = vmatpush1.msra.mxu0 0.0
        %404 = vmatprep.subr.mxu0 0.0
        %405 = vmatpush1.msra.mxu0 0.0
        %406 = vmatprep.subr.mxu0 0.0
        %407 = vmatpush1.msra.mxu0 0.0
        %408 = vmatprep.subr.mxu0 0.0
        %409 = vmatpush1.msra.mxu0 0.0
        %410 = vmatprep.subr.mxu0 0.0
        %411 = vmatpush1.msra.mxu0 0.0
        %412 = vmatprep.mubr.f32.mxu0 0.0
        %v413 = vand.u32 %v336, 4294901760
        %v414 = vsub.f32 %v336, %v413
        %v415 = vand.u32 %v414, 4294901760
        %v416 = vsub.f32 %v414, %v415
        %v417 = vand.u32 %v416, 4294901760
        %418 = vmatmul.mubr.f32.gmra.mrb[0].mxu0 %v417
        %v419 = vpop.f32.mrb[0].mxu0
        %v420 = vadd.f32 0.0, %v419
        %v421 = vpop.f32.mrb[0].mxu0
        %422 = vmatprep.mubr.f32.mxu0 0.0
        %v423 = vand.u32 %v339, 4294901760
        %v424 = vsub.f32 %v339, %v423
        %v425 = vand.u32 %v424, 4294901760
        %v426 = vsub.f32 %v424, %v425
        %v427 = vand.u32 %v426, 4294901760
        %428 = vmatmul.mubr.f32.gmra.mrb[0].mxu0 %v427
        %v429 = vpop.f32.mrb[0].mxu0
        %v430 = vadd.f32 0.0, %v429
        %v431 = vpop.f32.mrb[0].mxu0
        %432 = vmatprep.mubr.f32.mxu0 0.0
        %v433 = vand.u32 %v342, 4294901760
        %v434 = vsub.f32 %v342, %v433
        %v435 = vand.u32 %v434, 4294901760
        %v436 = vsub.f32 %v434, %v435
        %v437 = vand.u32 %v436, 4294901760
        %438 = vmatmul.mubr.f32.gmra.mrb[0].mxu0 %v437
        %v439 = vpop.f32.mrb[0].mxu0
        %v440 = vadd.f32 0.0, %v439
        %v441 = vpop.f32.mrb[0].mxu0
        %442 = vmatprep.mubr.f32.mxu0 0.0
        %v443 = vand.u32 %v345, 4294901760
        %v444 = vsub.f32 %v345, %v443
        %v445 = vand.u32 %v444, 4294901760
        %v446 = vsub.f32 %v444, %v445
        %v447 = vand.u32 %v446, 4294901760
        %448 = vmatmul.mubr.f32.gmra.mrb[0].mxu0 %v447
        %v449 = vpop.f32.mrb[0].mxu0
        %v450 = vadd.f32 0.0, %v449
        %v451 = vpop.f32.mrb[0].mxu0
        %452 = vdwg.mxu0
        %453 = vmatprep.subr.mxu0 0.0
        %v454 = vand.u32 %v292, 4294901760
        %v455 = vsub.f32 %v292, %v454
        %v456 = vand.u32 %v455, 4294901760
        %v457 = vsub.f32 %v455, %v456
        %v458 = vand.u32 %v457, 4294901760
        %459 = vmatpush1.msra.mxu0 %v458
        %460 = vmatprep.subr.mxu0 0.0
        %461 = vmatpush1.msra.mxu0 0.0
        %462 = vmatprep.subr.mxu0 0.0
        %463 = vmatpush1.msra.mxu0 0.0
        %464 = vmatprep.subr.mxu0 0.0
        %465 = vmatpush1.msra.mxu0 0.0
        %466 = vmatprep.subr.mxu0 0.0
        %467 = vmatpush1.msra.mxu0 0.0
        %468 = vmatprep.subr.mxu0 0.0
        %469 = vmatpush1.msra.mxu0 0.0
        %470 = vmatprep.subr.mxu0 0.0
        %471 = vmatpush1.msra.mxu0 0.0
        %472 = vmatprep.subr.mxu0 0.0
        %473 = vmatpush1.msra.mxu0 0.0
        %474 = vmatprep.subr.mxu0 0.0
        %475 = vmatpush1.msra.mxu0 0.0
        %476 = vmatprep.subr.mxu0 0.0
        %477 = vmatpush1.msra.mxu0 0.0
        %478 = vmatprep.subr.mxu0 0.0
        %479 = vmatpush1.msra.mxu0 0.0
        %480 = vmatprep.subr.mxu0 0.0
        %481 = vmatpush1.msra.mxu0 0.0
        %482 = vmatprep.subr.mxu0 0.0
        %483 = vmatpush1.msra.mxu0 0.0
        %484 = vmatprep.subr.mxu0 0.0
        %485 = vmatpush1.msra.mxu0 0.0
        %486 = vmatprep.subr.mxu0 0.0
        %487 = vmatpush1.msra.mxu0 0.0
        %488 = vmatprep.subr.mxu0 0.0
        %489 = vmatpush1.msra.mxu0 0.0
        %490 = vmatprep.subr.mxu0 0.0
        %491 = vmatpush1.msra.mxu0 0.0
        %492 = vmatprep.subr.mxu0 0.0
        %493 = vmatpush1.msra.mxu0 0.0
        %494 = vmatprep.subr.mxu0 0.0
        %495 = vmatpush1.msra.mxu0 0.0
        %496 = vmatprep.subr.mxu0 0.0
        %497 = vmatpush1.msra.mxu0 0.0
        %498 = vmatprep.subr.mxu0 0.0
        %499 = vmatpush1.msra.mxu0 0.0
        %500 = vmatprep.subr.mxu0 0.0
        %501 = vmatpush1.msra.mxu0 0.0
        %502 = vmatprep.subr.mxu0 0.0
        %503 = vmatpush1.msra.mxu0 0.0
        %504 = vmatprep.subr.mxu0 0.0
        %505 = vmatpush1.msra.mxu0 0.0
        %506 = vmatprep.subr.mxu0 0.0
        %507 = vmatpush1.msra.mxu0 0.0
        %508 = vmatprep.subr.mxu0 0.0
        %509 = vmatpush1.msra.mxu0 0.0
        %510 = vmatprep.subr.mxu0 0.0
        %511 = vmatpush1.msra.mxu0 0.0
        %512 = vmatprep.subr.mxu0 0.0
        %513 = vmatpush1.msra.mxu0 0.0
        %514 = vmatprep.subr.mxu0 0.0
        %515 = vmatpush1.msra.mxu0 0.0
        %516 = vmatprep.subr.mxu0 0.0
        %517 = vmatpush1.msra.mxu0 0.0
        %518 = vmatprep.subr.mxu0 0.0
        %519 = vmatpush1.msra.mxu0 0.0
        %520 = vmatprep.subr.mxu0 0.0
        %521 = vmatpush1.msra.mxu0 0.0
        %522 = vmatprep.mubr.f32.mxu0 0.0
        %v523 = vand.u32 %v336, 4294901760
        %524 = vmatmul.mubr.f32.gmra.mrb[0].mxu0 %v523
        %v525 = vpop.f32.mrb[0].mxu0
        %v526 = vadd.f32 %v420, %v525
        %v527 = vpop.f32.mrb[0].mxu0
        %528 = vmatprep.mubr.f32.mxu0 0.0
        %v529 = vand.u32 %v339, 4294901760
        %530 = vmatmul.mubr.f32.gmra.mrb[0].mxu0 %v529
        %v531 = vpop.f32.mrb[0].mxu0
        %v532 = vadd.f32 %v430, %v531
        %v533 = vpop.f32.mrb[0].mxu0
        %534 = vmatprep.mubr.f32.mxu0 0.0
        %v535 = vand.u32 %v342, 4294901760
        %536 = vmatmul.mubr.f32.gmra.mrb[0].mxu0 %v535
        %v537 = vpop.f32.mrb[0].mxu0
        %v538 = vadd.f32 %v440, %v537
        %v539 = vpop.f32.mrb[0].mxu0
        %540 = vmatprep.mubr.f32.mxu0 0.0
        %v541 = vand.u32 %v345, 4294901760
        %542 = vmatmul.mubr.f32.gmra.mrb[0].mxu0 %v541
        %v543 = vpop.f32.mrb[0].mxu0
        %v544 = vadd.f32 %v450, %v543
        %v545 = vpop.f32.mrb[0].mxu0
        %546 = vdwg.mxu0
        %547 = vmatprep.subr.mxu0 0.0
        %v548 = vand.u32 %v292, 4294901760
        %v549 = vsub.f32 %v292, %v548
        %550 = vmatpush1.msra.mxu0 %v549
        %551 = vmatprep.subr.mxu0 0.0
        %552 = vmatpush1.msra.mxu0 0.0
        %553 = vmatprep.subr.mxu0 0.0
        %554 = vmatpush1.msra.mxu0 0.0
        %555 = vmatprep.subr.mxu0 0.0
        %556 = vmatpush1.msra.mxu0 0.0
        %557 = vmatprep.subr.mxu0 0.0
        %558 = vmatpush1.msra.mxu0 0.0
        %559 = vmatprep.subr.mxu0 0.0
        %560 = vmatpush1.msra.mxu0 0.0
        %561 = vmatprep.subr.mxu0 0.0
        %562 = vmatpush1.msra.mxu0 0.0
        %563 = vmatprep.subr.mxu0 0.0
        %564 = vmatpush1.msra.mxu0 0.0
        %565 = vmatprep.subr.mxu0 0.0
        %566 = vmatpush1.msra.mxu0 0.0
        %567 = vmatprep.subr.mxu0 0.0
        %568 = vmatpush1.msra.mxu0 0.0
        %569 = vmatprep.subr.mxu0 0.0
        %570 = vmatpush1.msra.mxu0 0.0
        %571 = vmatprep.subr.mxu0 0.0
        %572 = vmatpush1.msra.mxu0 0.0
        %573 = vmatprep.subr.mxu0 0.0
        %574 = vmatpush1.msra.mxu0 0.0
        %575 = vmatprep.subr.mxu0 0.0
        %576 = vmatpush1.msra.mxu0 0.0
        %577 = vmatprep.subr.mxu0 0.0
        %578 = vmatpush1.msra.mxu0 0.0
        %579 = vmatprep.subr.mxu0 0.0
        %580 = vmatpush1.msra.mxu0 0.0
        %581 = vmatprep.subr.mxu0 0.0
        %582 = vmatpush1.msra.mxu0 0.0
        %583 = vmatprep.subr.mxu0 0.0
        %584 = vmatpush1.msra.mxu0 0.0
        %585 = vmatprep.subr.mxu0 0.0
        %586 = vmatpush1.msra.mxu0 0.0
        %587 = vmatprep.subr.mxu0 0.0
        %588 = vmatpush1.msra.mxu0 0.0
        %589 = vmatprep.subr.mxu0 0.0
        %590 = vmatpush1.msra.mxu0 0.0
        %591 = vmatprep.subr.mxu0 0.0
        %592 = vmatpush1.msra.mxu0 0.0
        %593 = vmatprep.subr.mxu0 0.0
        %594 = vmatpush1.msra.mxu0 0.0
        %595 = vmatprep.subr.mxu0 0.0
        %596 = vmatpush1.msra.mxu0 0.0
        %597 = vmatprep.subr.mxu0 0.0
        %598 = vmatpush1.msra.mxu0 0.0
        %599 = vmatprep.subr.mxu0 0.0
        %600 = vmatpush1.msra.mxu0 0.0
        %601 = vmatprep.subr.mxu0 0.0
        %602 = vmatpush1.msra.mxu0 0.0
        %603 = vmatprep.subr.mxu0 0.0
        %604 = vmatpush1.msra.mxu0 0.0
        %605 = vmatprep.subr.mxu0 0.0
        %606 = vmatpush1.msra.mxu0 0.0
        %607 = vmatprep.subr.mxu0 0.0
        %608 = vmatpush1.msra.mxu0 0.0
        %609 = vmatprep.subr.mxu0 0.0
        %610 = vmatpush1.msra.mxu0 0.0
        %611 = vmatprep.subr.mxu0 0.0
        %612 = vmatpush1.msra.mxu0 0.0
        %613 = vmatprep.mubr.f32.mxu0 0.0
        %v614 = vand.u32 %v336, 4294901760
        %v615 = vsub.f32 %v336, %v614
        %616 = vmatmul.mubr.f32.gmra.mrb[0].mxu0 %v615
        %v617 = vpop.f32.mrb[0].mxu0
        %v618 = vadd.f32 %v526, %v617
        %v619 = vpop.f32.mrb[0].mxu0
        %620 = vmatprep.mubr.f32.mxu0 0.0
        %v621 = vand.u32 %v339, 4294901760
        %v622 = vsub.f32 %v339, %v621
        %623 = vmatmul.mubr.f32.gmra.mrb[0].mxu0 %v622
        %v624 = vpop.f32.mrb[0].mxu0
        %v625 = vadd.f32 %v532, %v624
        %v626 = vpop.f32.mrb[0].mxu0
        %627 = vmatprep.mubr.f32.mxu0 0.0
        %v628 = vand.u32 %v342, 4294901760
        %v629 = vsub.f32 %v342, %v628
        %630 = vmatmul.mubr.f32.gmra.mrb[0].mxu0 %v629
        %v631 = vpop.f32.mrb[0].mxu0
        %v632 = vadd.f32 %v538, %v631
        %v633 = vpop.f32.mrb[0].mxu0
        %634 = vmatprep.mubr.f32.mxu0 0.0
        %v635 = vand.u32 %v345, 4294901760
        %v636 = vsub.f32 %v345, %v635
        %637 = vmatmul.mubr.f32.gmra.mrb[0].mxu0 %v636
        %v638 = vpop.f32.mrb[0].mxu0
        %v639 = vadd.f32 %v544, %v638
        %v640 = vpop.f32.mrb[0].mxu0
        %641 = vdwg.mxu0
        %642 = vmatprep.subr.mxu0 0.0
        %v643 = vand.u32 %v292, 4294901760
        %644 = vmatpush1.msra.mxu0 %v643
        %645 = vmatprep.subr.mxu0 0.0
        %646 = vmatpush1.msra.mxu0 0.0
        %647 = vmatprep.subr.mxu0 0.0
        %648 = vmatpush1.msra.mxu0 0.0
        %649 = vmatprep.subr.mxu0 0.0
        %650 = vmatpush1.msra.mxu0 0.0
        %651 = vmatprep.subr.mxu0 0.0
        %652 = vmatpush1.msra.mxu0 0.0
        %653 = vmatprep.subr.mxu0 0.0
        %654 = vmatpush1.msra.mxu0 0.0
        %655 = vmatprep.subr.mxu0 0.0
        %656 = vmatpush1.msra.mxu0 0.0
        %657 = vmatprep.subr.mxu0 0.0
        %658 = vmatpush1.msra.mxu0 0.0
        %659 = vmatprep.subr.mxu0 0.0
        %660 = vmatpush1.msra.mxu0 0.0
        %661 = vmatprep.subr.mxu0 0.0
        %662 = vmatpush1.msra.mxu0 0.0
        %663 = vmatprep.subr.mxu0 0.0
        %664 = vmatpush1.msra.mxu0 0.0
        %665 = vmatprep.subr.mxu0 0.0
        %666 = vmatpush1.msra.mxu0 0.0
        %667 = vmatprep.subr.mxu0 0.0
        %668 = vmatpush1.msra.mxu0 0.0
        %669 = vmatprep.subr.mxu0 0.0
        %670 = vmatpush1.msra.mxu0 0.0
        %671 = vmatprep.subr.mxu0 0.0
        %672 = vmatpush1.msra.mxu0 0.0
        %673 = vmatprep.subr.mxu0 0.0
        %674 = vmatpush1.msra.mxu0 0.0
        %675 = vmatprep.subr.mxu0 0.0
        %676 = vmatpush1.msra.mxu0 0.0
        %677 = vmatprep.subr.mxu0 0.0
        %678 = vmatpush1.msra.mxu0 0.0
        %679 = vmatprep.subr.mxu0 0.0
        %680 = vmatpush1.msra.mxu0 0.0
        %681 = vmatprep.subr.mxu0 0.0
        %682 = vmatpush1.msra.mxu0 0.0
        %683 = vmatprep.subr.mxu0 0.0
        %684 = vmatpush1.msra.mxu0 0.0
        %685 = vmatprep.subr.mxu0 0.0
        %686 = vmatpush1.msra.mxu0 0.0
        %687 = vmatprep.subr.mxu0 0.0
        %688 = vmatpush1.msra.mxu0 0.0
        %689 = vmatprep.subr.mxu0 0.0
        %690 = vmatpush1.msra.mxu0 0.0
        %691 = vmatprep.subr.mxu0 0.0
        %692 = vmatpush1.msra.mxu0 0.0
        %693 = vmatprep.subr.mxu0 0.0
        %694 = vmatpush1.msra.mxu0 0.0
        %695 = vmatprep.subr.mxu0 0.0
        %696 = vmatpush1.msra.mxu0 0.0
        %697 = vmatprep.subr.mxu0 0.0
        %698 = vmatpush1.msra.mxu0 0.0
        %699 = vmatprep.subr.mxu0 0.0
        %700 = vmatpush1.msra.mxu0 0.0
        %701 = vmatprep.subr.mxu0 0.0
        %702 = vmatpush1.msra.mxu0 0.0
        %703 = vmatprep.subr.mxu0 0.0
        %704 = vmatpush1.msra.mxu0 0.0
        %705 = vmatprep.subr.mxu0 0.0
        %706 = vmatpush1.msra.mxu0 0.0
        %707 = vmatprep.mubr.f32.mxu0 0.0
        %v708 = vand.u32 %v336, 4294901760
        %v709 = vsub.f32 %v336, %v708
        %v710 = vand.u32 %v709, 4294901760
        %711 = vmatmul.mubr.f32.gmra.mrb[0].mxu0 %v710
        %v712 = vpop.f32.mrb[0].mxu0
        %v713 = vadd.f32 %v618, %v712
        %v714 = vpop.f32.mrb[0].mxu0
        %715 = vmatprep.mubr.f32.mxu0 0.0
        %v716 = vand.u32 %v339, 4294901760
        %v717 = vsub.f32 %v339, %v716
        %v718 = vand.u32 %v717, 4294901760
        %719 = vmatmul.mubr.f32.gmra.mrb[0].mxu0 %v718
        %v720 = vpop.f32.mrb[0].mxu0
        %v721 = vadd.f32 %v625, %v720
        %v722 = vpop.f32.mrb[0].mxu0
        %723 = vmatprep.mubr.f32.mxu0 0.0
        %v724 = vand.u32 %v342, 4294901760
        %v725 = vsub.f32 %v342, %v724
        %v726 = vand.u32 %v725, 4294901760
        %727 = vmatmul.mubr.f32.gmra.mrb[0].mxu0 %v726
        %v728 = vpop.f32.mrb[0].mxu0
        %v729 = vadd.f32 %v632, %v728
        %v730 = vpop.f32.mrb[0].mxu0
        %731 = vmatprep.mubr.f32.mxu0 0.0
        %v732 = vand.u32 %v345, 4294901760
        %v733 = vsub.f32 %v345, %v732
        %v734 = vand.u32 %v733, 4294901760
        %735 = vmatmul.mubr.f32.gmra.mrb[0].mxu0 %v734
        %v736 = vpop.f32.mrb[0].mxu0
        %v737 = vadd.f32 %v639, %v736
        %v738 = vpop.f32.mrb[0].mxu0
        %739 = vdwg.mxu0
        %740 = vmatprep.subr.mxu0 0.0
        %v741 = vand.u32 %v292, 4294901760
        %v742 = vsub.f32 %v292, %v741
        %v743 = vand.u32 %v742, 4294901760
        %744 = vmatpush1.msra.mxu0 %v743
        %745 = vmatprep.subr.mxu0 0.0
        %746 = vmatpush1.msra.mxu0 0.0
        %747 = vmatprep.subr.mxu0 0.0
        %748 = vmatpush1.msra.mxu0 0.0
        %749 = vmatprep.subr.mxu0 0.0
        %750 = vmatpush1.msra.mxu0 0.0
        %751 = vmatprep.subr.mxu0 0.0
        %752 = vmatpush1.msra.mxu0 0.0
        %753 = vmatprep.subr.mxu0 0.0
        %754 = vmatpush1.msra.mxu0 0.0
        %755 = vmatprep.subr.mxu0 0.0
        %756 = vmatpush1.msra.mxu0 0.0
        %757 = vmatprep.subr.mxu0 0.0
        %758 = vmatpush1.msra.mxu0 0.0
        %759 = vmatprep.subr.mxu0 0.0
        %760 = vmatpush1.msra.mxu0 0.0
        %761 = vmatprep.subr.mxu0 0.0
        %762 = vmatpush1.msra.mxu0 0.0
        %763 = vmatprep.subr.mxu0 0.0
        %764 = vmatpush1.msra.mxu0 0.0
        %765 = vmatprep.subr.mxu0 0.0
        %766 = vmatpush1.msra.mxu0 0.0
        %767 = vmatprep.subr.mxu0 0.0
        %768 = vmatpush1.msra.mxu0 0.0
        %769 = vmatprep.subr.mxu0 0.0
        %770 = vmatpush1.msra.mxu0 0.0
        %771 = vmatprep.subr.mxu0 0.0
        %772 = vmatpush1.msra.mxu0 0.0
        %773 = vmatprep.subr.mxu0 0.0
        %774 = vmatpush1.msra.mxu0 0.0
        %775 = vmatprep.subr.mxu0 0.0
        %776 = vmatpush1.msra.mxu0 0.0
        %777 = vmatprep.subr.mxu0 0.0
        %778 = vmatpush1.msra.mxu0 0.0
        %779 = vmatprep.subr.mxu0 0.0
        %780 = vmatpush1.msra.mxu0 0.0
        %781 = vmatprep.subr.mxu0 0.0
        %782 = vmatpush1.msra.mxu0 0.0
        %783 = vmatprep.subr.mxu0 0.0
        %784 = vmatpush1.msra.mxu0 0.0
        %785 = vmatprep.subr.mxu0 0.0
        %786 = vmatpush1.msra.mxu0 0.0
        %787 = vmatprep.subr.mxu0 0.0
        %788 = vmatpush1.msra.mxu0 0.0
        %789 = vmatprep.subr.mxu0 0.0
        %790 = vmatpush1.msra.mxu0 0.0
        %791 = vmatprep.subr.mxu0 0.0
        %792 = vmatpush1.msra.mxu0 0.0
        %793 = vmatprep.subr.mxu0 0.0
        %794 = vmatpush1.msra.mxu0 0.0
        %795 = vmatprep.subr.mxu0 0.0
        %796 = vmatpush1.msra.mxu0 0.0
        %797 = vmatprep.subr.mxu0 0.0
        %798 = vmatpush1.msra.mxu0 0.0
        %799 = vmatprep.subr.mxu0 0.0
        %800 = vmatpush1.msra.mxu0 0.0
        %801 = vmatprep.subr.mxu0 0.0
        %802 = vmatpush1.msra.mxu0 0.0
        %803 = vmatprep.subr.mxu0 0.0
        %804 = vmatpush1.msra.mxu0 0.0
        %805 = vmatprep.subr.mxu0 0.0
        %806 = vmatpush1.msra.mxu0 0.0
        %807 = vmatprep.mubr.f32.mxu0 0.0
        %v808 = vand.u32 %v336, 4294901760
        %809 = vmatmul.mubr.f32.gmra.mrb[0].mxu0 %v808
        %v810 = vpop.f32.mrb[0].mxu0
        %v811 = vadd.f32 %v713, %v810
        %v812 = vpop.f32.mrb[0].mxu0
        %813 = vmatprep.mubr.f32.mxu0 0.0
        %v814 = vand.u32 %v339, 4294901760
        %815 = vmatmul.mubr.f32.gmra.mrb[0].mxu0 %v814
        %v816 = vpop.f32.mrb[0].mxu0
        %v817 = vadd.f32 %v721, %v816
        %v818 = vpop.f32.mrb[0].mxu0
        %819 = vmatprep.mubr.f32.mxu0 0.0
        %v820 = vand.u32 %v342, 4294901760
        %821 = vmatmul.mubr.f32.gmra.mrb[0].mxu0 %v820
        %v822 = vpop.f32.mrb[0].mxu0
        %v823 = vadd.f32 %v729, %v822
        %v824 = vpop.f32.mrb[0].mxu0
        %825 = vmatprep.mubr.f32.mxu0 0.0
        %v826 = vand.u32 %v345, 4294901760
        %827 = vmatmul.mubr.f32.gmra.mrb[0].mxu0 %v826
        %v828 = vpop.f32.mrb[0].mxu0
        %v829 = vadd.f32 %v737, %v828
        %v830 = vpop.f32.mrb[0].mxu0
        %831 = vdwg.mxu0
        %832 = vmatprep.subr.mxu0 0.0
        %v833 = vand.u32 %v292, 4294901760
        %834 = vmatpush1.msra.mxu0 %v833
        %835 = vmatprep.subr.mxu0 0.0
        %836 = vmatpush1.msra.mxu0 0.0
        %837 = vmatprep.subr.mxu0 0.0
        %838 = vmatpush1.msra.mxu0 0.0
        %839 = vmatprep.subr.mxu0 0.0
        %840 = vmatpush1.msra.mxu0 0.0
        %841 = vmatprep.subr.mxu0 0.0
        %842 = vmatpush1.msra.mxu0 0.0
        %843 = vmatprep.subr.mxu0 0.0
        %844 = vmatpush1.msra.mxu0 0.0
        %845 = vmatprep.subr.mxu0 0.0
        %846 = vmatpush1.msra.mxu0 0.0
        %847 = vmatprep.subr.mxu0 0.0
        %848 = vmatpush1.msra.mxu0 0.0
        %849 = vmatprep.subr.mxu0 0.0
        %850 = vmatpush1.msra.mxu0 0.0
        %851 = vmatprep.subr.mxu0 0.0
        %852 = vmatpush1.msra.mxu0 0.0
        %853 = vmatprep.subr.mxu0 0.0
        %854 = vmatpush1.msra.mxu0 0.0
        %855 = vmatprep.subr.mxu0 0.0
        %856 = vmatpush1.msra.mxu0 0.0
        %857 = vmatprep.subr.mxu0 0.0
        %858 = vmatpush1.msra.mxu0 0.0
        %859 = vmatprep.subr.mxu0 0.0
        %860 = vmatpush1.msra.mxu0 0.0
        %861 = vmatprep.subr.mxu0 0.0
        %862 = vmatpush1.msra.mxu0 0.0
        %863 = vmatprep.subr.mxu0 0.0
        %864 = vmatpush1.msra.mxu0 0.0
        %865 = vmatprep.subr.mxu0 0.0
        %866 = vmatpush1.msra.mxu0 0.0
        %867 = vmatprep.subr.mxu0 0.0
        %868 = vmatpush1.msra.mxu0 0.0
        %869 = vmatprep.subr.mxu0 0.0
        %870 = vmatpush1.msra.mxu0 0.0
        %871 = vmatprep.subr.mxu0 0.0
        %872 = vmatpush1.msra.mxu0 0.0
        %873 = vmatprep.subr.mxu0 0.0
        %874 = vmatpush1.msra.mxu0 0.0
        %875 = vmatprep.subr.mxu0 0.0
        %876 = vmatpush1.msra.mxu0 0.0
        %877 = vmatprep.subr.mxu0 0.0
        %878 = vmatpush1.msra.mxu0 0.0
        %879 = vmatprep.subr.mxu0 0.0
        %880 = vmatpush1.msra.mxu0 0.0
        %881 = vmatprep.subr.mxu0 0.0
        %882 = vmatpush1.msra.mxu0 0.0
        %883 = vmatprep.subr.mxu0 0.0
        %884 = vmatpush1.msra.mxu0 0.0
        %885 = vmatprep.subr.mxu0 0.0
        %886 = vmatpush1.msra.mxu0 0.0
        %887 = vmatprep.subr.mxu0 0.0
        %888 = vmatpush1.msra.mxu0 0.0
        %889 = vmatprep.subr.mxu0 0.0
        %890 = vmatpush1.msra.mxu0 0.0
        %891 = vmatprep.subr.mxu0 0.0
        %892 = vmatpush1.msra.mxu0 0.0
        %893 = vmatprep.subr.mxu0 0.0
        %894 = vmatpush1.msra.mxu0 0.0
        %895 = vmatprep.subr.mxu0 0.0
        %896 = vmatpush1.msra.mxu0 0.0
        %897 = vmatprep.mubr.f32.mxu0 0.0
        %v898 = vand.u32 %v336, 4294901760
        %899 = vmatmul.mubr.f32.gmra.mrb[0].mxu0 %v898
        %v900 = vpop.f32.mrb[0].mxu0
        %v901 = vadd.f32 %v811, %v900
        %v902 = vpop.f32.mrb[0].mxu0
        %903 = vmatprep.mubr.f32.mxu0 0.0
        %v904 = vand.u32 %v339, 4294901760
        %905 = vmatmul.mubr.f32.gmra.mrb[0].mxu0 %v904
        %v906 = vpop.f32.mrb[0].mxu0
        %v907 = vadd.f32 %v817, %v906
        %v908 = vpop.f32.mrb[0].mxu0
        %909 = vmatprep.mubr.f32.mxu0 0.0
        %v910 = vand.u32 %v342, 4294901760
        %911 = vmatmul.mubr.f32.gmra.mrb[0].mxu0 %v910
        %v912 = vpop.f32.mrb[0].mxu0
        %v913 = vadd.f32 %v823, %v912
        %v914 = vpop.f32.mrb[0].mxu0
        %915 = vmatprep.mubr.f32.mxu0 0.0
        %v916 = vand.u32 %v345, 4294901760
        %917 = vmatmul.mubr.f32.gmra.mrb[0].mxu0 %v916
        %v918 = vpop.f32.mrb[0].mxu0
        %v919 = vadd.f32 %v829, %v918
        %v920 = vpop.f32.mrb[0].mxu0
        %921 = vdwg.mxu0
        %v922 = vadd.f32 %v298, %v901
        %v923 = vadd.f32 %v299, %v907
        %v924 = vadd.f32 %v300, %v913
        %v925 = vadd.f32 %v301, %v919
        %vm926 = vcmask 261120
        %927 = vst.msk [vmem:[#allocation2] sm:$0xff] %vm926, %v922
        %928 = vst.msk [vmem:[#allocation2 + $0x8] sm:$0xff] %vm926, %v923
        %929 = vst.msk [vmem:[#allocation2 + $0x10] sm:$0xff] %vm926, %v924
        %930 = vst.msk [vmem:[#allocation2 + $0x18] sm:$0xff] %vm926, %v925
        %v931 = vld [vmem:[#allocation3] sm:$0x1]
        %v932 = vsel %vm926, %v297, 0.0
        %v933 = vrot.slane %v932, 4
        %v934 = vadd.f32 %v932, %v933
        %v935 = vrot.slane %v934, 2
        %v936 = vadd.f32 %v934, %v935
        %v937 = vrot.slane %v936, 1
        %v938 = vadd.f32 %v936, %v937
        %v939 = vadd.f32 %v931, %v938
        %vm940 = vcmask 253952
        %941 = vst.msk [vmem:[#allocation3] sm:$0x1] %vm940, %v939
        %p942 = scmp.eq.s32.totalorder %s28, 1
        // Predicated region
        $region49: #{tpu_custom_call.1} parent=31 // pred_check
          %p943 = pneg %p942
        $region50: #{tpu_custom_call.1} parent=31 // pred_check_branch
          %945 = sbr.rel (%p943) target = $region52
        $region51: #{tpu_custom_call.1} parent=31 // pred_region
          %v946 = vld [vmem:[%s229] sm:$0xff]
          %v947 = vld [vmem:[%s229 + $0x8] sm:$0xff]
          %vm948 = vcmp.gt.f32.partialorder %v946, 0.0
          %vm949 = vcmp.gt.f32.partialorder %v947, 0.0
          %v950 = vadd.f32 %v946, 1.0
          %v951 = vadd.f32 %v947, 1.0
          %v952 = vmul.f32 %v946, 1.442695
          %v953 = vpow.pop %v952
          %v954 = vmul.f32 %v947, 1.442695
          %v955 = vpow.pop %v954
          %v956 = vsel %vm948, %v950, %v953
          %v957 = vsel %vm949, %v951, %v955
          %v958 = vld [vmem:[#allocation3] sm:$0x1]
          %v960 = vlaneseq
          %v961 = vshrl.u32 %v960, 7
          %v962 = vsub.s32 0, %v961
          %v963 = vrot.slane %v958, %v962
          %v965 = vmul.f32 %v956, %v963
          %v966 = vmul.f32 %v957, %v963
          %v967 = vsel %vm926, %v965, 0.0
          %968 = vadd.xlane.f32.xlu0 %v967
          %v969 = vpop.xlane.xlu0 %968
          %v970 = vsel %vm926, %v966, 0.0
          %971 = vadd.xlane.f32.xlu0 %v970
          %v972 = vpop.xlane.xlu0 %971
          %v973 = vadd.f32 %v969, 1e-06
          %v974 = vadd.f32 %v972, 1e-06
          %v975 = vld [vmem:[#allocation2] sm:$0xff]
          %v976 = vld [vmem:[#allocation2 + $0x8] sm:$0xff]
          %v977 = vld [vmem:[#allocation2 + $0x10] sm:$0xff]
          %v978 = vld [vmem:[#allocation2 + $0x18] sm:$0xff]
          %v980 = vsel %vm926, %v956, 0
          %v983 = vsel %vm926, %v957, 0
          %985 = vmatprep.subr.mxu0 0.0
          %v986 = vand.u32 %v975, 4294901760
          %987 = vmatpush1.msra.mxu0 %v986
          %988 = vmatprep.subr.mxu0 0.0
          %v989 = vand.u32 %v976, 4294901760
          %990 = vmatpush1.msra.mxu0 %v989
          %991 = vmatprep.subr.mxu0 0.0
          %v992 = vand.u32 %v977, 4294901760
          %993 = vmatpush1.msra.mxu0 %v992
          %994 = vmatprep.subr.mxu0 0.0
          %v995 = vand.u32 %v978, 4294901760
          %996 = vmatpush1.msra.mxu0 %v995
          %997 = vmatprep.subr.mxu0 0.0
          %998 = vmatpush1.msra.mxu0 0.0
          %999 = vmatprep.subr.mxu0 0.0
          %1000 = vmatpush1.msra.mxu0 0.0
          %1001 = vmatprep.subr.mxu0 0.0
          %1002 = vmatpush1.msra.mxu0 0.0
          %1003 = vmatprep.subr.mxu0 0.0
          %1004 = vmatpush1.msra.mxu0 0.0
          %1005 = vmatprep.subr.mxu0 0.0
          %1006 = vmatpush1.msra.mxu0 0.0
          %1007 = vmatprep.subr.mxu0 0.0
          %1008 = vmatpush1.msra.mxu0 0.0
          %1009 = vmatprep.subr.mxu0 0.0
          %1010 = vmatpush1.msra.mxu0 0.0
          %1011 = vmatprep.subr.mxu0 0.0
          %1012 = vmatpush1.msra.mxu0 0.0
          %1013 = vmatprep.subr.mxu0 0.0
          %1014 = vmatpush1.msra.mxu0 0.0
          %1015 = vmatprep.subr.mxu0 0.0
          %1016 = vmatpush1.msra.mxu0 0.0
          %1017 = vmatprep.subr.mxu0 0.0
          %1018 = vmatpush1.msra.mxu0 0.0
          %1019 = vmatprep.subr.mxu0 0.0
          %1020 = vmatpush1.msra.mxu0 0.0
          %1021 = vmatprep.subr.mxu0 0.0
          %1022 = vmatpush1.msra.mxu0 0.0
          %1023 = vmatprep.subr.mxu0 0.0
          %1024 = vmatpush1.msra.mxu0 0.0
          %1025 = vmatprep.subr.mxu0 0.0
          %1026 = vmatpush1.msra.mxu0 0.0
          %1027 = vmatprep.subr.mxu0 0.0
          %1028 = vmatpush1.msra.mxu0 0.0
          %1029 = vmatprep.subr.mxu0 0.0
          %1030 = vmatpush1.msra.mxu0 0.0
          %1031 = vmatprep.subr.mxu0 0.0
          %1032 = vmatpush1.msra.mxu0 0.0
          %1033 = vmatprep.subr.mxu0 0.0
          %1034 = vmatpush1.msra.mxu0 0.0
          %1035 = vmatprep.subr.mxu0 0.0
          %1036 = vmatpush1.msra.mxu0 0.0
          %1037 = vmatprep.subr.mxu0 0.0
          %1038 = vmatpush1.msra.mxu0 0.0
          %1039 = vmatprep.subr.mxu0 0.0
          %1040 = vmatpush1.msra.mxu0 0.0
          %1041 = vmatprep.subr.mxu0 0.0
          %1042 = vmatpush1.msra.mxu0 0.0
          %1043 = vmatprep.subr.mxu0 0.0
          %1044 = vmatpush1.msra.mxu0 0.0
          %1045 = vmatprep.subr.mxu0 0.0
          %1046 = vmatpush1.msra.mxu0 0.0
          %1047 = vmatprep.subr.mxu0 0.0
          %1048 = vmatpush1.msra.mxu0 0.0
          %1049 = vmatprep.subr.mxu0 0.0
          %1050 = vmatpush1.msra.mxu0 0.0
          %1051 = vmatprep.subr.mxu0 0.0
          %1052 = vmatpush1.msra.mxu0 0.0
          %1053 = vmatprep.mubr.f32.mxu0 0.0
          %v1054 = vand.u32 %v980, 4294901760
          %v1055 = vsub.f32 %v980, %v1054
          %v1056 = vand.u32 %v1055, 4294901760
          %v1057 = vsub.f32 %v1055, %v1056
          %v1058 = vand.u32 %v1057, 4294901760
          %1059 = vmatmul.mubr.f32.gmra.mrb[0].mxu0 %v1058
          %v1060 = vpop.f32.mrb[0].mxu0
          %v1061 = vadd.f32 0.0, %v1060
          %v1062 = vpop.f32.mrb[0].mxu0
          %1063 = vmatprep.mubr.f32.mxu0 0.0
          %v1064 = vand.u32 %v983, 4294901760
          %v1065 = vsub.f32 %v983, %v1064
          %v1066 = vand.u32 %v1065, 4294901760
          %v1067 = vsub.f32 %v1065, %v1066
          %v1068 = vand.u32 %v1067, 4294901760
          %1069 = vmatmul.mubr.f32.gmra.mrb[0].mxu0 %v1068
          %v1070 = vpop.f32.mrb[0].mxu0
          %v1071 = vadd.f32 0.0, %v1070
          %v1072 = vpop.f32.mrb[0].mxu0
          %1073 = vdwg.mxu0
          %1074 = vmatprep.subr.mxu0 0.0
          %v1075 = vand.u32 %v975, 4294901760
          %v1076 = vsub.f32 %v975, %v1075
          %v1077 = vand.u32 %v1076, 4294901760
          %v1078 = vsub.f32 %v1076, %v1077
          %v1079 = vand.u32 %v1078, 4294901760
          %1080 = vmatpush1.msra.mxu0 %v1079
          %1081 = vmatprep.subr.mxu0 0.0
          %v1082 = vand.u32 %v976, 4294901760
          %v1083 = vsub.f32 %v976, %v1082
          %v1084 = vand.u32 %v1083, 4294901760
          %v1085 = vsub.f32 %v1083, %v1084
          %v1086 = vand.u32 %v1085, 4294901760
          %1087 = vmatpush1.msra.mxu0 %v1086
          %1088 = vmatprep.subr.mxu0 0.0
          %v1089 = vand.u32 %v977, 4294901760
          %v1090 = vsub.f32 %v977, %v1089
          %v1091 = vand.u32 %v1090, 4294901760
          %v1092 = vsub.f32 %v1090, %v1091
          %v1093 = vand.u32 %v1092, 4294901760
          %1094 = vmatpush1.msra.mxu0 %v1093
          %1095 = vmatprep.subr.mxu0 0.0
          %v1096 = vand.u32 %v978, 4294901760
          %v1097 = vsub.f32 %v978, %v1096
          %v1098 = vand.u32 %v1097, 4294901760
          %v1099 = vsub.f32 %v1097, %v1098
          %v1100 = vand.u32 %v1099, 4294901760
          %1101 = vmatpush1.msra.mxu0 %v1100
          %1102 = vmatprep.subr.mxu0 0.0
          %1103 = vmatpush1.msra.mxu0 0.0
          %1104 = vmatprep.subr.mxu0 0.0
          %1105 = vmatpush1.msra.mxu0 0.0
          %1106 = vmatprep.subr.mxu0 0.0
          %1107 = vmatpush1.msra.mxu0 0.0
          %1108 = vmatprep.subr.mxu0 0.0
          %1109 = vmatpush1.msra.mxu0 0.0
          %1110 = vmatprep.subr.mxu0 0.0
          %1111 = vmatpush1.msra.mxu0 0.0
          %1112 = vmatprep.subr.mxu0 0.0
          %1113 = vmatpush1.msra.mxu0 0.0
          %1114 = vmatprep.subr.mxu0 0.0
          %1115 = vmatpush1.msra.mxu0 0.0
          %1116 = vmatprep.subr.mxu0 0.0
          %1117 = vmatpush1.msra.mxu0 0.0
          %1118 = vmatprep.subr.mxu0 0.0
          %1119 = vmatpush1.msra.mxu0 0.0
          %1120 = vmatprep.subr.mxu0 0.0
          %1121 = vmatpush1.msra.mxu0 0.0
          %1122 = vmatprep.subr.mxu0 0.0
          %1123 = vmatpush1.msra.mxu0 0.0
          %1124 = vmatprep.subr.mxu0 0.0
          %1125 = vmatpush1.msra.mxu0 0.0
          %1126 = vmatprep.subr.mxu0 0.0
          %1127 = vmatpush1.msra.mxu0 0.0
          %1128 = vmatprep.subr.mxu0 0.0
          %1129 = vmatpush1.msra.mxu0 0.0
          %1130 = vmatprep.subr.mxu0 0.0
          %1131 = vmatpush1.msra.mxu0 0.0
          %1132 = vmatprep.subr.mxu0 0.0
          %1133 = vmatpush1.msra.mxu0 0.0
          %1134 = vmatprep.subr.mxu0 0.0
          %1135 = vmatpush1.msra.mxu0 0.0
          %1136 = vmatprep.subr.mxu0 0.0
          %1137 = vmatpush1.msra.mxu0 0.0
          %1138 = vmatprep.subr.mxu0 0.0
          %1139 = vmatpush1.msra.mxu0 0.0
          %1140 = vmatprep.subr.mxu0 0.0
          %1141 = vmatpush1.msra.mxu0 0.0
          %1142 = vmatprep.subr.mxu0 0.0
          %1143 = vmatpush1.msra.mxu0 0.0
          %1144 = vmatprep.subr.mxu0 0.0
          %1145 = vmatpush1.msra.mxu0 0.0
          %1146 = vmatprep.subr.mxu0 0.0
          %1147 = vmatpush1.msra.mxu0 0.0
          %1148 = vmatprep.subr.mxu0 0.0
          %1149 = vmatpush1.msra.mxu0 0.0
          %1150 = vmatprep.subr.mxu0 0.0
          %1151 = vmatpush1.msra.mxu0 0.0
          %1152 = vmatprep.subr.mxu0 0.0
          %1153 = vmatpush1.msra.mxu0 0.0
          %1154 = vmatprep.subr.mxu0 0.0
          %1155 = vmatpush1.msra.mxu0 0.0
          %1156 = vmatprep.subr.mxu0 0.0
          %1157 = vmatpush1.msra.mxu0 0.0
          %1158 = vmatprep.mubr.f32.mxu0 0.0
          %v1159 = vand.u32 %v980, 4294901760
          %1160 = vmatmul.mubr.f32.gmra.mrb[0].mxu0 %v1159
          %v1161 = vpop.f32.mrb[0].mxu0
          %v1162 = vadd.f32 %v1061, %v1161
          %v1163 = vpop.f32.mrb[0].mxu0
          %1164 = vmatprep.mubr.f32.mxu0 0.0
          %v1165 = vand.u32 %v983, 4294901760
          %1166 = vmatmul.mubr.f32.gmra.mrb[0].mxu0 %v1165
          %v1167 = vpop.f32.mrb[0].mxu0
          %v1168 = vadd.f32 %v1071, %v1167
          %v1169 = vpop.f32.mrb[0].mxu0
          %1170 = vdwg.mxu0
          %1171 = vmatprep.subr.mxu0 0.0
          %v1172 = vand.u32 %v975, 4294901760
          %v1173 = vsub.f32 %v975, %v1172
          %1174 = vmatpush1.msra.mxu0 %v1173
          %1175 = vmatprep.subr.mxu0 0.0
          %v1176 = vand.u32 %v976, 4294901760
          %v1177 = vsub.f32 %v976, %v1176
          %1178 = vmatpush1.msra.mxu0 %v1177
          %1179 = vmatprep.subr.mxu0 0.0
          %v1180 = vand.u32 %v977, 4294901760
          %v1181 = vsub.f32 %v977, %v1180
          %1182 = vmatpush1.msra.mxu0 %v1181
          %1183 = vmatprep.subr.mxu0 0.0
          %v1184 = vand.u32 %v978, 4294901760
          %v1185 = vsub.f32 %v978, %v1184
          %1186 = vmatpush1.msra.mxu0 %v1185
          %1187 = vmatprep.subr.mxu0 0.0
          %1188 = vmatpush1.msra.mxu0 0.0
          %1189 = vmatprep.subr.mxu0 0.0
          %1190 = vmatpush1.msra.mxu0 0.0
          %1191 = vmatprep.subr.mxu0 0.0
          %1192 = vmatpush1.msra.mxu0 0.0
          %1193 = vmatprep.subr.mxu0 0.0
          %1194 = vmatpush1.msra.mxu0 0.0
          %1195 = vmatprep.subr.mxu0 0.0
          %1196 = vmatpush1.msra.mxu0 0.0
          %1197 = vmatprep.subr.mxu0 0.0
          %1198 = vmatpush1.msra.mxu0 0.0
          %1199 = vmatprep.subr.mxu0 0.0
          %1200 = vmatpush1.msra.mxu0 0.0
          %1201 = vmatprep.subr.mxu0 0.0
          %1202 = vmatpush1.msra.mxu0 0.0
          %1203 = vmatprep.subr.mxu0 0.0
          %1204 = vmatpush1.msra.mxu0 0.0
          %1205 = vmatprep.subr.mxu0 0.0
          %1206 = vmatpush1.msra.mxu0 0.0
          %1207 = vmatprep.subr.mxu0 0.0
          %1208 = vmatpush1.msra.mxu0 0.0
          %1209 = vmatprep.subr.mxu0 0.0
          %1210 = vmatpush1.msra.mxu0 0.0
          %1211 = vmatprep.subr.mxu0 0.0
          %1212 = vmatpush1.msra.mxu0 0.0
          %1213 = vmatprep.subr.mxu0 0.0
          %1214 = vmatpush1.msra.mxu0 0.0
          %1215 = vmatprep.subr.mxu0 0.0
          %1216 = vmatpush1.msra.mxu0 0.0
          %1217 = vmatprep.subr.mxu0 0.0
          %1218 = vmatpush1.msra.mxu0 0.0
          %1219 = vmatprep.subr.mxu0 0.0
          %1220 = vmatpush1.msra.mxu0 0.0
          %1221 = vmatprep.subr.mxu0 0.0
          %1222 = vmatpush1.msra.mxu0 0.0
          %1223 = vmatprep.subr.mxu0 0.0
          %1224 = vmatpush1.msra.mxu0 0.0
          %1225 = vmatprep.subr.mxu0 0.0
          %1226 = vmatpush1.msra.mxu0 0.0
          %1227 = vmatprep.subr.mxu0 0.0
          %1228 = vmatpush1.msra.mxu0 0.0
          %1229 = vmatprep.subr.mxu0 0.0
          %1230 = vmatpush1.msra.mxu0 0.0
          %1231 = vmatprep.subr.mxu0 0.0
          %1232 = vmatpush1.msra.mxu0 0.0
          %1233 = vmatprep.subr.mxu0 0.0
          %1234 = vmatpush1.msra.mxu0 0.0
          %1235 = vmatprep.subr.mxu0 0.0
          %1236 = vmatpush1.msra.mxu0 0.0
          %1237 = vmatprep.subr.mxu0 0.0
          %1238 = vmatpush1.msra.mxu0 0.0
          %1239 = vmatprep.subr.mxu0 0.0
          %1240 = vmatpush1.msra.mxu0 0.0
          %1241 = vmatprep.subr.mxu0 0.0
          %1242 = vmatpush1.msra.mxu0 0.0
          %1243 = vmatprep.mubr.f32.mxu0 0.0
          %v1244 = vand.u32 %v980, 4294901760
          %v1245 = vsub.f32 %v980, %v1244
          %1246 = vmatmul.mubr.f32.gmra.mrb[0].mxu0 %v1245
          %v1247 = vpop.f32.mrb[0].mxu0
          %v1248 = vadd.f32 %v1162, %v1247
          %v1249 = vpop.f32.mrb[0].mxu0
          %1250 = vmatprep.mubr.f32.mxu0 0.0
          %v1251 = vand.u32 %v983, 4294901760
          %v1252 = vsub.f32 %v983, %v1251
          %1253 = vmatmul.mubr.f32.gmra.mrb[0].mxu0 %v1252
          %v1254 = vpop.f32.mrb[0].mxu0
          %v1255 = vadd.f32 %v1168, %v1254
          %v1256 = vpop.f32.mrb[0].mxu0
          %1257 = vdwg.mxu0
          %1258 = vmatprep.subr.mxu0 0.0
          %v1259 = vand.u32 %v975, 4294901760
          %1260 = vmatpush1.msra.mxu0 %v1259
          %1261 = vmatprep.subr.mxu0 0.0
          %v1262 = vand.u32 %v976, 4294901760
          %1263 = vmatpush1.msra.mxu0 %v1262
          %1264 = vmatprep.subr.mxu0 0.0
          %v1265 = vand.u32 %v977, 4294901760
          %1266 = vmatpush1.msra.mxu0 %v1265
          %1267 = vmatprep.subr.mxu0 0.0
          %v1268 = vand.u32 %v978, 4294901760
          %1269 = vmatpush1.msra.mxu0 %v1268
          %1270 = vmatprep.subr.mxu0 0.0
          %1271 = vmatpush1.msra.mxu0 0.0
          %1272 = vmatprep.subr.mxu0 0.0
          %1273 = vmatpush1.msra.mxu0 0.0
          %1274 = vmatprep.subr.mxu0 0.0
          %1275 = vmatpush1.msra.mxu0 0.0
          %1276 = vmatprep.subr.mxu0 0.0
          %1277 = vmatpush1.msra.mxu0 0.0
          %1278 = vmatprep.subr.mxu0 0.0
          %1279 = vmatpush1.msra.mxu0 0.0
          %1280 = vmatprep.subr.mxu0 0.0
          %1281 = vmatpush1.msra.mxu0 0.0
          %1282 = vmatprep.subr.mxu0 0.0
          %1283 = vmatpush1.msra.mxu0 0.0
          %1284 = vmatprep.subr.mxu0 0.0
          %1285 = vmatpush1.msra.mxu0 0.0
          %1286 = vmatprep.subr.mxu0 0.0
          %1287 = vmatpush1.msra.mxu0 0.0
          %1288 = vmatprep.subr.mxu0 0.0
          %1289 = vmatpush1.msra.mxu0 0.0
          %1290 = vmatprep.subr.mxu0 0.0
          %1291 = vmatpush1.msra.mxu0 0.0
          %1292 = vmatprep.subr.mxu0 0.0
          %1293 = vmatpush1.msra.mxu0 0.0
          %1294 = vmatprep.subr.mxu0 0.0
          %1295 = vmatpush1.msra.mxu0 0.0
          %1296 = vmatprep.subr.mxu0 0.0
          %1297 = vmatpush1.msra.mxu0 0.0
          %1298 = vmatprep.subr.mxu0 0.0
          %1299 = vmatpush1.msra.mxu0 0.0
          %1300 = vmatprep.subr.mxu0 0.0
          %1301 = vmatpush1.msra.mxu0 0.0
          %1302 = vmatprep.subr.mxu0 0.0
          %1303 = vmatpush1.msra.mxu0 0.0
          %1304 = vmatprep.subr.mxu0 0.0
          %1305 = vmatpush1.msra.mxu0 0.0
          %1306 = vmatprep.subr.mxu0 0.0
          %1307 = vmatpush1.msra.mxu0 0.0
          %1308 = vmatprep.subr.mxu0 0.0
          %1309 = vmatpush1.msra.mxu0 0.0
          %1310 = vmatprep.subr.mxu0 0.0
          %1311 = vmatpush1.msra.mxu0 0.0
          %1312 = vmatprep.subr.mxu0 0.0
          %1313 = vmatpush1.msra.mxu0 0.0
          %1314 = vmatprep.subr.mxu0 0.0
          %1315 = vmatpush1.msra.mxu0 0.0
          %1316 = vmatprep.subr.mxu0 0.0
          %1317 = vmatpush1.msra.mxu0 0.0
          %1318 = vmatprep.subr.mxu0 0.0
          %1319 = vmatpush1.msra.mxu0 0.0
          %1320 = vmatprep.subr.mxu0 0.0
          %1321 = vmatpush1.msra.mxu0 0.0
          %1322 = vmatprep.subr.mxu0 0.0
          %1323 = vmatpush1.msra.mxu0 0.0
          %1324 = vmatprep.subr.mxu0 0.0
          %1325 = vmatpush1.msra.mxu0 0.0
          %1326 = vmatprep.mubr.f32.mxu0 0.0
          %v1327 = vand.u32 %v980, 4294901760
          %v1328 = vsub.f32 %v980, %v1327
          %v1329 = vand.u32 %v1328, 4294901760
          %1330 = vmatmul.mubr.f32.gmra.mrb[0].mxu0 %v1329
          %v1331 = vpop.f32.mrb[0].mxu0
          %v1332 = vadd.f32 %v1248, %v1331
          %v1333 = vpop.f32.mrb[0].mxu0
          %1334 = vmatprep.mubr.f32.mxu0 0.0
          %v1335 = vand.u32 %v983, 4294901760
          %v1336 = vsub.f32 %v983, %v1335
          %v1337 = vand.u32 %v1336, 4294901760
          %1338 = vmatmul.mubr.f32.gmra.mrb[0].mxu0 %v1337
          %v1339 = vpop.f32.mrb[0].mxu0
          %v1340 = vadd.f32 %v1255, %v1339
          %v1341 = vpop.f32.mrb[0].mxu0
          %1342 = vdwg.mxu0
          %1343 = vmatprep.subr.mxu0 0.0
          %v1344 = vand.u32 %v975, 4294901760
          %v1345 = vsub.f32 %v975, %v1344
          %v1346 = vand.u32 %v1345, 4294901760
          %1347 = vmatpush1.msra.mxu0 %v1346
          %1348 = vmatprep.subr.mxu0 0.0
          %v1349 = vand.u32 %v976, 4294901760
          %v1350 = vsub.f32 %v976, %v1349
          %v1351 = vand.u32 %v1350, 4294901760
          %1352 = vmatpush1.msra.mxu0 %v1351
          %1353 = vmatprep.subr.mxu0 0.0
          %v1354 = vand.u32 %v977, 4294901760
          %v1355 = vsub.f32 %v977, %v1354
          %v1356 = vand.u32 %v1355, 4294901760
          %1357 = vmatpush1.msra.mxu0 %v1356
          %1358 = vmatprep.subr.mxu0 0.0
          %v1359 = vand.u32 %v978, 4294901760
          %v1360 = vsub.f32 %v978, %v1359
          %v1361 = vand.u32 %v1360, 4294901760
          %1362 = vmatpush1.msra.mxu0 %v1361
          %1363 = vmatprep.subr.mxu0 0.0
          %1364 = vmatpush1.msra.mxu0 0.0
          %1365 = vmatprep.subr.mxu0 0.0
          %1366 = vmatpush1.msra.mxu0 0.0
          %1367 = vmatprep.subr.mxu0 0.0
          %1368 = vmatpush1.msra.mxu0 0.0
          %1369 = vmatprep.subr.mxu0 0.0
          %1370 = vmatpush1.msra.mxu0 0.0
          %1371 = vmatprep.subr.mxu0 0.0
          %1372 = vmatpush1.msra.mxu0 0.0
          %1373 = vmatprep.subr.mxu0 0.0
          %1374 = vmatpush1.msra.mxu0 0.0
          %1375 = vmatprep.subr.mxu0 0.0
          %1376 = vmatpush1.msra.mxu0 0.0
          %1377 = vmatprep.subr.mxu0 0.0
          %1378 = vmatpush1.msra.mxu0 0.0
          %1379 = vmatprep.subr.mxu0 0.0
          %1380 = vmatpush1.msra.mxu0 0.0
          %1381 = vmatprep.subr.mxu0 0.0
          %1382 = vmatpush1.msra.mxu0 0.0
          %1383 = vmatprep.subr.mxu0 0.0
          %1384 = vmatpush1.msra.mxu0 0.0
          %1385 = vmatprep.subr.mxu0 0.0
          %1386 = vmatpush1.msra.mxu0 0.0
          %1387 = vmatprep.subr.mxu0 0.0
          %1388 = vmatpush1.msra.mxu0 0.0
          %1389 = vmatprep.subr.mxu0 0.0
          %1390 = vmatpush1.msra.mxu0 0.0
          %1391 = vmatprep.subr.mxu0 0.0
          %1392 = vmatpush1.msra.mxu0 0.0
          %1393 = vmatprep.subr.mxu0 0.0
          %1394 = vmatpush1.msra.mxu0 0.0
          %1395 = vmatprep.subr.mxu0 0.0
          %1396 = vmatpush1.msra.mxu0 0.0
          %1397 = vmatprep.subr.mxu0 0.0
          %1398 = vmatpush1.msra.mxu0 0.0
          %1399 = vmatprep.subr.mxu0 0.0
          %1400 = vmatpush1.msra.mxu0 0.0
          %1401 = vmatprep.subr.mxu0 0.0
          %1402 = vmatpush1.msra.mxu0 0.0
          %1403 = vmatprep.subr.mxu0 0.0
          %1404 = vmatpush1.msra.mxu0 0.0
          %1405 = vmatprep.subr.mxu0 0.0
          %1406 = vmatpush1.msra.mxu0 0.0
          %1407 = vmatprep.subr.mxu0 0.0
          %1408 = vmatpush1.msra.mxu0 0.0
          %1409 = vmatprep.subr.mxu0 0.0
          %1410 = vmatpush1.msra.mxu0 0.0
          %1411 = vmatprep.subr.mxu0 0.0
          %1412 = vmatpush1.msra.mxu0 0.0
          %1413 = vmatprep.subr.mxu0 0.0
          %1414 = vmatpush1.msra.mxu0 0.0
          %1415 = vmatprep.subr.mxu0 0.0
          %1416 = vmatpush1.msra.mxu0 0.0
          %1417 = vmatprep.subr.mxu0 0.0
          %1418 = vmatpush1.msra.mxu0 0.0
          %1419 = vmatprep.mubr.f32.mxu0 0.0
          %v1420 = vand.u32 %v980, 4294901760
          %1421 = vmatmul.mubr.f32.gmra.mrb[0].mxu0 %v1420
          %v1422 = vpop.f32.mrb[0].mxu0
          %v1423 = vadd.f32 %v1332, %v1422
          %v1424 = vpop.f32.mrb[0].mxu0
          %1425 = vmatprep.mubr.f32.mxu0 0.0
          %v1426 = vand.u32 %v983, 4294901760
          %1427 = vmatmul.mubr.f32.gmra.mrb[0].mxu0 %v1426
          %v1428 = vpop.f32.mrb[0].mxu0
          %v1429 = vadd.f32 %v1340, %v1428
          %v1430 = vpop.f32.mrb[0].mxu0
          %1431 = vdwg.mxu0
          %1432 = vmatprep.subr.mxu0 0.0
          %v1433 = vand.u32 %v975, 4294901760
          %1434 = vmatpush1.msra.mxu0 %v1433
          %1435 = vmatprep.subr.mxu0 0.0
          %v1436 = vand.u32 %v976, 4294901760
          %1437 = vmatpush1.msra.mxu0 %v1436
          %1438 = vmatprep.subr.mxu0 0.0
          %v1439 = vand.u32 %v977, 4294901760
          %1440 = vmatpush1.msra.mxu0 %v1439
          %1441 = vmatprep.subr.mxu0 0.0
          %v1442 = vand.u32 %v978, 4294901760
          %1443 = vmatpush1.msra.mxu0 %v1442
          %1444 = vmatprep.subr.mxu0 0.0
          %1445 = vmatpush1.msra.mxu0 0.0
          %1446 = vmatprep.subr.mxu0 0.0
          %1447 = vmatpush1.msra.mxu0 0.0
          %1448 = vmatprep.subr.mxu0 0.0
          %1449 = vmatpush1.msra.mxu0 0.0
          %1450 = vmatprep.subr.mxu0 0.0
          %1451 = vmatpush1.msra.mxu0 0.0
          %1452 = vmatprep.subr.mxu0 0.0
          %1453 = vmatpush1.msra.mxu0 0.0
          %1454 = vmatprep.subr.mxu0 0.0
          %1455 = vmatpush1.msra.mxu0 0.0
          %1456 = vmatprep.subr.mxu0 0.0
          %1457 = vmatpush1.msra.mxu0 0.0
          %1458 = vmatprep.subr.mxu0 0.0
          %1459 = vmatpush1.msra.mxu0 0.0
          %1460 = vmatprep.subr.mxu0 0.0
          %1461 = vmatpush1.msra.mxu0 0.0
          %1462 = vmatprep.subr.mxu0 0.0
          %1463 = vmatpush1.msra.mxu0 0.0
          %1464 = vmatprep.subr.mxu0 0.0
          %1465 = vmatpush1.msra.mxu0 0.0
          %1466 = vmatprep.subr.mxu0 0.0
          %1467 = vmatpush1.msra.mxu0 0.0
          %1468 = vmatprep.subr.mxu0 0.0
          %1469 = vmatpush1.msra.mxu0 0.0
          %1470 = vmatprep.subr.mxu0 0.0
          %1471 = vmatpush1.msra.mxu0 0.0
          %1472 = vmatprep.subr.mxu0 0.0
          %1473 = vmatpush1.msra.mxu0 0.0
          %1474 = vmatprep.subr.mxu0 0.0
          %1475 = vmatpush1.msra.mxu0 0.0
          %1476 = vmatprep.subr.mxu0 0.0
          %1477 = vmatpush1.msra.mxu0 0.0
          %1478 = vmatprep.subr.mxu0 0.0
          %1479 = vmatpush1.msra.mxu0 0.0
          %1480 = vmatprep.subr.mxu0 0.0
          %1481 = vmatpush1.msra.mxu0 0.0
          %1482 = vmatprep.subr.mxu0 0.0
          %1483 = vmatpush1.msra.mxu0 0.0
          %1484 = vmatprep.subr.mxu0 0.0
          %1485 = vmatpush1.msra.mxu0 0.0
          %1486 = vmatprep.subr.mxu0 0.0
          %1487 = vmatpush1.msra.mxu0 0.0
          %1488 = vmatprep.subr.mxu0 0.0
          %1489 = vmatpush1.msra.mxu0 0.0
          %1490 = vmatprep.subr.mxu0 0.0
          %1491 = vmatpush1.msra.mxu0 0.0
          %1492 = vmatprep.subr.mxu0 0.0
          %1493 = vmatpush1.msra.mxu0 0.0
          %1494 = vmatprep.subr.mxu0 0.0
          %1495 = vmatpush1.msra.mxu0 0.0
          %1496 = vmatprep.subr.mxu0 0.0
          %1497 = vmatpush1.msra.mxu0 0.0
          %1498 = vmatprep.subr.mxu0 0.0
          %1499 = vmatpush1.msra.mxu0 0.0
          %1500 = vmatprep.mubr.f32.mxu0 0.0
          %v1501 = vand.u32 %v980, 4294901760
          %1502 = vmatmul.mubr.f32.gmra.mrb[0].mxu0 %v1501
          %v1503 = vpop.f32.mrb[0].mxu0
          %v1504 = vadd.f32 %v1423, %v1503
          %v1505 = vpop.f32.mrb[0].mxu0
          %1506 = vmatprep.mubr.f32.mxu0 0.0
          %v1507 = vand.u32 %v983, 4294901760
          %1508 = vmatmul.mubr.f32.gmra.mrb[0].mxu0 %v1507
          %v1509 = vpop.f32.mrb[0].mxu0
          %v1510 = vadd.f32 %v1429, %v1509
          %v1511 = vpop.f32.mrb[0].mxu0
          %1512 = vdwg.mxu0
          %v1513 = vrcp.pop %v973
          %v1514 = vmul.f32 %v1504, %v1513
          %v1515 = vrcp.pop %v974
          %v1516 = vmul.f32 %v1510, %v1515
          %1517 = vst.msk [vmem:[%s279] sm:$0xff] %vm926, %v1514
          %1518 = vst.msk [vmem:[%s279 + $0x8] sm:$0xff] %vm926, %v1516
        $region52: #{tpu_custom_call.1} parent=31 // pred_fallthru
          _
        %s1519 = sand.u32 %s125, 1
        %s1520 = scalar_lea.sflag [#allocation6], %s1519
        %s1521 = sand.u32 %s125, 1
        %s1522 = smul.addr %s1521, 16
        %s1523 = scalar_lea.vmem [#allocation10], %s1522
        // Predicated region
        $region53: #{tpu_custom_call.1} parent=31 // pred_check
          %p1524 = pneg %p135
        $region54: #{tpu_custom_call.1} parent=31 // pred_check_branch
          %1526 = sbr.rel (%p1524) target = $region56
        $region55: #{tpu_custom_call.1} parent=31 // pred_region
          %s1528 = ssub.s32 256, 256
          %1529 = vsyncadd %s1520, %s1528
          %s1530 = smul.addr %s27, 2
          %s1531 = smul.addr %s1530, 128
          %s1532 = scalar_lea.hbm %s3, %s1531
          %s1533 = sshll.u32 %s1523, 4
          %s1534 = int_to_ptr.vmem [resolvable:$true] %s1533
          %1539 = dma.vmem_to_hbm [thread:$0]  %s1534, 256, %s1532, %s1520, 128, 128, 8
        $region56: #{tpu_custom_call.1} parent=31 // pred_fallthru
          _
      $region32: #{tpu_custom_call.1} parent=5 // pred_fallthru
        _
      %p1540 = scmp.le.s32.totalorder 2, %s18
      // Predicated region
      $region57: #{tpu_custom_call.1} parent=5 // pred_check
        %p1541 = pneg %p1540
      $region58: #{tpu_custom_call.1} parent=5 // pred_check_branch
        %1543 = sbr.rel (%p1541) target = $region60
      $region59: #{tpu_custom_call.1} parent=5 // pred_region
        %s1544 = ssub.s32 %s18, 2
        // Predicated region
        $region61: #{tpu_custom_call.1} parent=59 // pred_check
          %p1545 = pneg %p141
        $region62: #{tpu_custom_call.1} parent=59 // pred_check_branch
          %1547 = sbr.rel (%p1545) target = $region64
        $region63: #{tpu_custom_call.1} parent=59 // pred_region
          %s1548 = sand.u32 %s126, 1
          %s1549 = scalar_lea.sflag [#allocation6], %s1548
          %s1550 = sand.u32 %s126, 1
          %s1551 = smul.addr %s1550, 16
          %s1552 = scalar_lea.vmem [#allocation10], %s1551
          %1553 = dma.done %s1549, 256
        $region64: #{tpu_custom_call.1} parent=59 // pred_fallthru
          _
      $region60: #{tpu_custom_call.1} parent=5 // pred_fallthru
        _
    $region6: #{tpu_custom_call.1} parent=1 // loop_footer
      %s22 = sadd.s32 1, %s18
    $region7: #{tpu_custom_call.1} parent=1 // loop_footer_branch
      %17 = sbr.rel target = $region3
    $region8: #{tpu_custom_call.1} parent=1 // loop_exit
      _
    %1554 = vsyncpa [#allocation5], 1
    %s1555 = scalar_lea.sflag [#allocation5], 1
    %1556 = vsyncpa %s1555, 1
    %1557 = vsyncpa [#allocation8], 1
    %s1558 = scalar_lea.sflag [#allocation8], 1
    %1559 = vsyncpa %s1558, 1
    %1560 = vsyncpa [#allocation6], 1
    %s1561 = scalar_lea.sflag [#allocation6], 1
    %1562 = vsyncpa %s1561, 1

</llo_original>
